<compile_context>
chip_gen: v5e
topology: v5e:2x2
jax: 0.10.0
libtpu: 0.0.40
codegen_flags: <defaults>
</compile_context>

<pallas_src>
import functools
import itertools

import numpy as np
import jax
import jax.numpy as jnp
from jax import lax
from jax.experimental import pallas as pl
from jax.experimental.pallas import tpu as pltpu

# ---- static model configuration (small synthetic sizes) --------------------
H = W = 32          # image / mask spatial size
HW = H * W          # 1024 = 8 * 128 -> lane-dense when placed on the last axis
C_IN = 4            # image channels
C_FEAT = 32         # backbone feature channels
N_DET = 4           # synthetic number of mrcnn detections
N_CLS = 16          # classifier_head output size

OBJ_MASK_THRESHOLD = 0.5
PERSON_MASK_THRESHOLD = 0.8
SCORE_THRESHOLD = 0.25


# ---------------------------------------------------------------------------
# Fused kernel:
#   backbone (1x1 conv + ReLU, VPU/f32)      -> feat (C_FEAT, HW)
#   mask head + sigmoid (f32)                -> masks (N_DET, HW), scores (N_DET, 1)
#   torch.where thresholding (>=, like ref)  -> binary person/object masks
#   soft_attention: per-DETECTION pooling    -> one (2*N_DET, HW)x(HW, C_FEAT) MXU op
#   classifier_head split per role           -> two (N_DET, C_FEAT)x(C_FEAT, N_CLS)
#   static per-pair row gather + add         -> preds (p_pad, N_CLS)
# ---------------------------------------------------------------------------
def _vrb_fused_kernel(x_ref, w1t_ref, b1_ref, wmt_ref, bm_ref,
                      wclsp_ref, wclso_ref, bcls_ref,
                      masks_ref, scores_ref, preds_ref, *, pairs, p_pad):
    # ---- backbone: 1x1 conv as C_IN broadcast FMAs on the VPU, f32 ---------
    x = x_ref[...]                                   # (C_IN, HW) f32
    w1t = w1t_ref[...]                               # (C_FEAT, C_IN) f32
    feat = b1_ref[...] + w1t[:, 0:1] * x[0:1, :]
    for c in range(1, C_IN):                         # static, unrolled (C_IN = 4)
        feat = feat + w1t[:, c:c + 1] * x[c:c + 1, :]
    feat = jnp.maximum(feat, 0.0)                    # (C_FEAT, HW) f32

    # ---- mask head (tiny f32 MXU matmul) + stable sigmoid (EUP tanh) -------
    logits = jnp.dot(wmt_ref[...], feat,
                     preferred_element_type=jnp.float32) + bm_ref[...]
    masks = 0.5 * jnp.tanh(0.5 * logits) + 0.5       # (N_DET, HW) f32
    masks_ref[...] = masks
    scores_ref[...] = jnp.mean(masks, axis=1, keepdims=True)   # (N_DET, 1)

    # ---- torch.where thresholding (>= matches the reference torch.where) ---
    person_bin = jnp.where(masks >= PERSON_MASK_THRESHOLD, 1.0, 0.0)
    obj_bin = jnp.where(masks >= OBJ_MASK_THRESHOLD, 1.0, 0.0)
    bin_all = jnp.concatenate([person_bin, obj_bin], axis=0)   # (2*N_DET, HW) f32

    # ---- soft attention: pool per-DETECTION first (single HW contraction) --
    counts = jnp.sum(bin_all, axis=1, keepdims=True)           # (2*N_DET, 1)
    pooled = lax.dot_general(bin_all.astype(jnp.bfloat16),
                             feat.astype(jnp.bfloat16),
                             dimension_numbers=(((1,), (1,)), ((), ())),
                             preferred_element_type=jnp.float32)  # (2*N_DET, C_FEAT)
    # +1e-6 deliberately guards empty thresholded masks (the PyTorch reference
    # would divide by zero there); reciprocal runs on the otherwise-idle EUP.
    pooled = pooled * pl.reciprocal(counts + 1e-6, approx=True)

    # ---- classifier head split per role (no lane-axis concat): --------------
    #   preds[k] = pooled_person[pi_k] @ W_cls[:C] + pooled_obj[oi_k] @ W_cls[C:] + b
    contrib_p = jnp.dot(pooled[:N_DET].astype(jnp.bfloat16), wclsp_ref[...],
                        preferred_element_type=jnp.float32)    # (N_DET, N_CLS)
    contrib_o = jnp.dot(pooled[N_DET:].astype(jnp.bfloat16), wclso_ref[...],
                        preferred_element_type=jnp.float32)    # (N_DET, N_CLS)

    # ---- static per-pair row gather + add (pairs are trace-time constants) --
    rows = []
    for k in range(p_pad):
        if k < len(pairs):
            pi, oi = pairs[k]
            rows.append(contrib_p[pi:pi + 1, :] + contrib_o[oi:oi + 1, :])
        else:  # padded rows (k >= len(pairs)) are bias-only filler, dropped on host
            rows.append(jnp.zeros((1, N_CLS), jnp.float32))
    preds_ref[...] = jnp.concatenate(rows, axis=0) + bcls_ref[...]   # (p_pad, N_CLS)


def _fused_call(x_chw, w1t, b1, wmt, bm, wclsp, wclso, bcls, pairs, p_pad):
    kernel = functools.partial(_vrb_fused_kernel, pairs=pairs, p_pad=p_pad)
    vmem = lambda: pl.BlockSpec(memory_space=pltpu.MemorySpace.VMEM)
    return pl.pallas_call(
        kernel,
        out_shape=(
            jax.ShapeDtypeStruct((N_DET, HW), jnp.float32),     # masks (lane-dense)
            jax.ShapeDtypeStruct((N_DET, 1), jnp.float32),      # per-detection scores
            jax.ShapeDtypeStruct((p_pad, N_CLS), jnp.float32),  # per-pair predictions
        ),
        in_specs=[vmem() for _ in range(8)],
        out_specs=(vmem(), vmem(), vmem()),
    )(x_chw, w1t, b1, wmt, bm, wclsp, wclso, bcls)


@functools.partial(jax.jit, static_argnames=("pairs", "p_pad"))
def _device_forward(img, w1t, b1, wmt, bm, wclsp, wclso, bcls, *, pairs, p_pad):
    # NCHW -> (C, H*W) is a free contiguous reshape, fused under the same jit
    # so there is exactly one device dispatch per forward call.
    x_chw = img[0].reshape(C_IN, H * W)
    return _fused_call(x_chw, w1t, b1, wmt, bm, wclsp, wclso, bcls, pairs, p_pad)


# ---------------------------------------------------------------------------
# Wrapper mirroring VRBFullModel.forward
# ---------------------------------------------------------------------------
def init_params(key):
    k1, k2, k3 = jax.random.split(key, 3)
    w_cls = 0.1 * jax.random.normal(k3, (2 * C_FEAT, N_CLS), jnp.float32)
    return dict(
        # backbone / mask head weights stored pre-transposed (feature-major),
        # kept in f32 so the hard mask thresholds see f32-accurate logits.
        w1t=0.1 * jax.random.normal(k1, (C_FEAT, C_IN), jnp.float32),
        b1=jnp.zeros((C_FEAT, 1), jnp.float32),
        wmt=0.2 * jax.random.normal(k2, (N_DET, C_FEAT), jnp.float32),
        bm=jnp.zeros((N_DET, 1), jnp.float32),
        # classifier head split per role and pre-cast to bf16 once (MXU operand).
        w_cls_p=w_cls[:C_FEAT].astype(jnp.bfloat16),
        w_cls_o=w_cls[C_FEAT:].astype(jnp.bfloat16),
        b_cls=jnp.zeros((1, N_CLS), jnp.float32),
        # synthetic detection classes: 4='female', 8='male', 1='backpack', 12='shoe'
        det_labels=np.array([4, 8, 1, 12], dtype=np.int32),
    )


def vrb_full_model_forward(img, params, targets=None):
    """img: (1, C_IN, H, W) float32 NCHW.  Returns (detections, predictions,
    person_obj_pairs, targets) mirroring VRBFullModel.forward."""
    # TODO(synk): full Mask R-CNN (RPN / RoIAlign / NMS) has no static Pallas
    # equivalent; detection class labels come from a fixed synthetic head, so
    # the person/object split is known at trace time (only the score test is
    # data-dependent and handled on host, exactly like the reference logic).
    labels_np = np.asarray(params["det_labels"])
    person_idx = [i for i in range(N_DET) if int(labels_np[i]) in (4, 8)]
    obj_idx = [i for i in range(N_DET) if int(labels_np[i]) not in (4, 8)]
    cand_pairs = tuple(itertools.product(person_idx, obj_idx))
    p_pad = max(8, ((len(cand_pairs) + 7) // 8) * 8)   # sublane-aligned pair count

    masks_flat, scores_col, preds = _device_forward(
        img, params["w1t"], params["b1"], params["wmt"], params["bm"],
        params["w_cls_p"], params["w_cls_o"], params["b_cls"],
        pairs=cand_pairs, p_pad=p_pad)

    detections = {
        "masks": masks_flat.reshape(N_DET, 1, H, W),   # lane-dense -> NCHW, pure reshape
        "labels": jnp.asarray(labels_np),
        "scores": scores_col[:, 0],
    }

    # Single device->host transfer for BOTH scores and preds, issued after the
    # one fused kernel is dispatched; needed only to materialize the Python
    # pair list and score-filter predictions, like the PyTorch selection logic.
    scores_host, preds_host = jax.device_get((scores_col, preds))
    scores_host = np.asarray(scores_host)[:, 0]
    preds_host = np.asarray(preds_host)

    person_obj_pairs = []
    predictions = []
    for k, (pi, oi) in enumerate(cand_pairs):
        if scores_host[pi] >= SCORE_THRESHOLD and scores_host[oi] >= SCORE_THRESHOLD:
            person_obj_pairs.append((pi, oi))
            predictions.append(preds_host[k:k + 1, :])   # (1, N_CLS) like classifier_head

    return detections, predictions, person_obj_pairs, targets


if __name__ == "__main__":
    key = jax.random.PRNGKey(0)
    pkey, ikey = jax.random.split(key)
    params = init_params(pkey)
    img = jax.random.normal(ikey, (1, C_IN, H, W), jnp.float32)   # NCHW like PyTorch

    detections, predictions, pairs, targets = vrb_full_model_forward(img, params)

    jax.block_until_ready(detections["masks"])
    jax.block_until_ready(detections["scores"])
    _ = [np.asarray(p) for p in predictions]   # already host-side numpy
    print("KERNEL_OK")
</pallas_src>

<mosaic_0001>
module attributes {stable_mosaic.version = 11 : i64} {
  func.func @_vrb_fused_kernel(%arg0: memref<4x1024xf32, #tpu.memory_space<vmem>>, %arg1: memref<32x4xf32, #tpu.memory_space<vmem>>, %arg2: memref<32x1xf32, #tpu.memory_space<vmem>>, %arg3: memref<4x32xf32, #tpu.memory_space<vmem>>, %arg4: memref<4x1xf32, #tpu.memory_space<vmem>>, %arg5: memref<32x16xbf16, #tpu.memory_space<vmem>>, %arg6: memref<32x16xbf16, #tpu.memory_space<vmem>>, %arg7: memref<1x16xf32, #tpu.memory_space<vmem>>, %arg8: memref<4x1024xf32, #tpu.memory_space<vmem>>, %arg9: memref<4x1xf32, #tpu.memory_space<vmem>>, %arg10: memref<8x16xf32, #tpu.memory_space<vmem>>) attributes {dimension_semantics = [], scalar_prefetch = 0 : i64, scratch_operands = 0 : i64, tpu.core_type = #tpu.core_type<tc>} {
    %c0 = arith.constant 0 : index
    %c0_0 = arith.constant 0 : index
    %0 = vector.load %arg0[%c0, %c0_0] : memref<4x1024xf32, #tpu.memory_space<vmem>>, vector<4x1024xf32>
    %c0_1 = arith.constant 0 : index
    %c0_2 = arith.constant 0 : index
    %1 = vector.load %arg1[%c0_1, %c0_2] : memref<32x4xf32, #tpu.memory_space<vmem>>, vector<32x4xf32>
    %c0_3 = arith.constant 0 : index
    %c0_4 = arith.constant 0 : index
    %2 = vector.load %arg2[%c0_3, %c0_4] : memref<32x1xf32, #tpu.memory_space<vmem>>, vector<32x1xf32>
    %3 = vector.extract_strided_slice %1 {offsets = [0, 0], sizes = [32, 1], strides = [1, 1]} : vector<32x4xf32> to vector<32x1xf32>
    %4 = vector.extract_strided_slice %0 {offsets = [0, 0], sizes = [1, 1024], strides = [1, 1]} : vector<4x1024xf32> to vector<1x1024xf32>
    %5 = vector.broadcast %3 : vector<32x1xf32> to vector<32x1024xf32>
    %6 = vector.broadcast %4 : vector<1x1024xf32> to vector<32x1024xf32>
    %7 = arith.mulf %5, %6 : vector<32x1024xf32>
    %8 = vector.broadcast %2 : vector<32x1xf32> to vector<32x1024xf32>
    %9 = arith.addf %8, %7 : vector<32x1024xf32>
    %10 = vector.extract_strided_slice %1 {offsets = [0, 1], sizes = [32, 1], strides = [1, 1]} : vector<32x4xf32> to vector<32x1xf32>
    %11 = vector.extract_strided_slice %0 {offsets = [1, 0], sizes = [1, 1024], strides = [1, 1]} : vector<4x1024xf32> to vector<1x1024xf32>
    %12 = vector.broadcast %10 : vector<32x1xf32> to vector<32x1024xf32>
    %13 = vector.broadcast %11 : vector<1x1024xf32> to vector<32x1024xf32>
    %14 = arith.mulf %12, %13 : vector<32x1024xf32>
    %15 = arith.addf %9, %14 : vector<32x1024xf32>
    %16 = vector.extract_strided_slice %1 {offsets = [0, 2], sizes = [32, 1], strides = [1, 1]} : vector<32x4xf32> to vector<32x1xf32>
    %17 = vector.extract_strided_slice %0 {offsets = [2, 0], sizes = [1, 1024], strides = [1, 1]} : vector<4x1024xf32> to vector<1x1024xf32>
    %18 = vector.broadcast %16 : vector<32x1xf32> to vector<32x1024xf32>
    %19 = vector.broadcast %17 : vector<1x1024xf32> to vector<32x1024xf32>
    %20 = arith.mulf %18, %19 : vector<32x1024xf32>
    %21 = arith.addf %15, %20 : vector<32x1024xf32>
    %22 = vector.extract_strided_slice %1 {offsets = [0, 3], sizes = [32, 1], strides = [1, 1]} : vector<32x4xf32> to vector<32x1xf32>
    %23 = vector.extract_strided_slice %0 {offsets = [3, 0], sizes = [1, 1024], strides = [1, 1]} : vector<4x1024xf32> to vector<1x1024xf32>
    %24 = vector.broadcast %22 : vector<32x1xf32> to vector<32x1024xf32>
    %25 = vector.broadcast %23 : vector<1x1024xf32> to vector<32x1024xf32>
    %26 = arith.mulf %24, %25 : vector<32x1024xf32>
    %27 = arith.addf %21, %26 : vector<32x1024xf32>
    %cst = arith.constant 0.000000e+00 : f32
    %28 = vector.broadcast %cst : f32 to vector<32x1024xf32>
    %29 = arith.maximumf %27, %28 : vector<32x1024xf32>
    %c0_5 = arith.constant 0 : index
    %c0_6 = arith.constant 0 : index
    %30 = vector.load %arg3[%c0_5, %c0_6] : memref<4x32xf32, #tpu.memory_space<vmem>>, vector<4x32xf32>
    %cst_7 = arith.constant dense<0.000000e+00> : vector<4x1024xf32>
    %31 = tpu.matmul %30, %29, %cst_7 {dimension_numbers = #tpu.dot_dimension_numbers<[1], [0], [0], [1], [0, 0, 1, 1], [], []>} : vector<4x32xf32>, vector<32x1024xf32>, vector<4x1024xf32> -> vector<4x1024xf32>
    %c0_8 = arith.constant 0 : index
    %c0_9 = arith.constant 0 : index
    %32 = vector.load %arg4[%c0_8, %c0_9] : memref<4x1xf32, #tpu.memory_space<vmem>>, vector<4x1xf32>
    %33 = vector.broadcast %32 : vector<4x1xf32> to vector<4x1024xf32>
    %34 = arith.addf %31, %33 : vector<4x1024xf32>
    %cst_10 = arith.constant 5.000000e-01 : f32
    %35 = vector.broadcast %cst_10 : f32 to vector<4x1024xf32>
    %36 = arith.mulf %35, %34 : vector<4x1024xf32>
    %37 = math.tanh %36 : vector<4x1024xf32>
    %cst_11 = arith.constant 5.000000e-01 : f32
    %38 = vector.broadcast %cst_11 : f32 to vector<4x1024xf32>
    %39 = arith.mulf %38, %37 : vector<4x1024xf32>
    %cst_12 = arith.constant 5.000000e-01 : f32
    %40 = vector.broadcast %cst_12 : f32 to vector<4x1024xf32>
    %41 = arith.addf %39, %40 : vector<4x1024xf32>
    %c0_13 = arith.constant 0 : index
    %c0_14 = arith.constant 0 : index
    %42 = vector.load %arg8[%c0_13, %c0_14] : memref<4x1024xf32, #tpu.memory_space<vmem>>, vector<4x1024xf32>
    tpu.vector_store %arg8[%c0_13, %c0_14], %41 {strides = array<i32>} : memref<4x1024xf32, #tpu.memory_space<vmem>>, vector<4x1024xf32>,
    %cst_15 = arith.constant dense<0.000000e+00> : vector<4xf32>
    %43 = vector.multi_reduction <add>, %41, %cst_15 [1] : vector<4x1024xf32> to vector<4xf32>
    %44 = vector.shape_cast %43 : vector<4xf32> to vector<4x1xf32>
    %cst_16 = arith.constant 1.024000e+03 : f32
    %45 = vector.broadcast %cst_16 : f32 to vector<4x1xf32>
    %46 = arith.divf %44, %45 : vector<4x1xf32>
    %c0_17 = arith.constant 0 : index
    %c0_18 = arith.constant 0 : index
    %47 = vector.load %arg9[%c0_17, %c0_18] : memref<4x1xf32, #tpu.memory_space<vmem>>, vector<4x1xf32>
    tpu.vector_store %arg9[%c0_17, %c0_18], %46 {strides = array<i32>} : memref<4x1xf32, #tpu.memory_space<vmem>>, vector<4x1xf32>,
    %cst_19 = arith.constant 8.000000e-01 : f32
    %48 = vector.broadcast %cst_19 : f32 to vector<4x1024xf32>
    %49 = arith.cmpf oge, %41, %48 : vector<4x1024xf32>
    %cst_20 = arith.constant 1.000000e+00 : f32
    %cst_21 = arith.constant 0.000000e+00 : f32
    %50 = vector.broadcast %cst_20 : f32 to vector<4x1024xf32>
    %51 = vector.broadcast %cst_21 : f32 to vector<4x1024xf32>
    %52 = arith.select %49, %50, %51 : vector<4x1024xi1>, vector<4x1024xf32>
    %cst_22 = arith.constant 5.000000e-01 : f32
    %53 = vector.broadcast %cst_22 : f32 to vector<4x1024xf32>
    %54 = arith.cmpf oge, %41, %53 : vector<4x1024xf32>
    %cst_23 = arith.constant 1.000000e+00 : f32
    %cst_24 = arith.constant 0.000000e+00 : f32
    %55 = vector.broadcast %cst_23 : f32 to vector<4x1024xf32>
    %56 = vector.broadcast %cst_24 : f32 to vector<4x1024xf32>
    %57 = arith.select %54, %55, %56 : vector<4x1024xi1>, vector<4x1024xf32>
    %58 = tpu.concatenate %52, %57 in 0 : vector<4x1024xf32>, vector<4x1024xf32> -> vector<8x1024xf32>
    %cst_25 = arith.constant dense<0.000000e+00> : vector<8xf32>
    %59 = vector.multi_reduction <add>, %58, %cst_25 [1] : vector<8x1024xf32> to vector<8xf32>
    %60 = vector.shape_cast %59 : vector<8xf32> to vector<8x1xf32>
    %61 = arith.truncf %58 : vector<8x1024xf32> to vector<8x1024xbf16>
    %62 = arith.truncf %29 : vector<32x1024xf32> to vector<32x1024xbf16>
    %cst_26 = arith.constant dense<0.000000e+00> : vector<8x32xf32>
    %63 = tpu.matmul %61, %62, %cst_26 {dimension_numbers = #tpu.dot_dimension_numbers<[1], [1], [0], [0], [0, 0, 1, 0], [], []>} : vector<8x1024xbf16>, vector<32x1024xbf16>, vector<8x32xf32> -> vector<8x32xf32>
    %cst_27 = arith.constant 9.99999997E-7 : f32
    %64 = vector.broadcast %cst_27 : f32 to vector<8x1xf32>
    %65 = arith.addf %60, %64 : vector<8x1xf32>
    %66 = tpu.reciprocal %65 {approx = true} : vector<8x1xf32> -> vector<8x1xf32>
    %67 = vector.broadcast %66 : vector<8x1xf32> to vector<8x32xf32>
    %68 = arith.mulf %63, %67 : vector<8x32xf32>
    %69 = vector.extract_strided_slice %68 {offsets = [0, 0], sizes = [4, 32], strides = [1, 1]} : vector<8x32xf32> to vector<4x32xf32>
    %70 = arith.truncf %69 : vector<4x32xf32> to vector<4x32xbf16>
    %c0_28 = arith.constant 0 : index
    %c0_29 = arith.constant 0 : index
    %71 = vector.load %arg5[%c0_28, %c0_29] : memref<32x16xbf16, #tpu.memory_space<vmem>>, vector<32x16xbf16>
    %cst_30 = arith.constant dense<0.000000e+00> : vector<4x16xf32>
    %72 = tpu.matmul %70, %71, %cst_30 {dimension_numbers = #tpu.dot_dimension_numbers<[1], [0], [0], [1], [0, 0, 1, 1], [], []>} : vector<4x32xbf16>, vector<32x16xbf16>, vector<4x16xf32> -> vector<4x16xf32>
    %73 = vector.extract_strided_slice %68 {offsets = [4, 0], sizes = [4, 32], strides = [1, 1]} : vector<8x32xf32> to vector<4x32xf32>
    %74 = arith.truncf %73 : vector<4x32xf32> to vector<4x32xbf16>
    %c0_31 = arith.constant 0 : index
    %c0_32 = arith.constant 0 : index
    %75 = vector.load %arg6[%c0_31, %c0_32] : memref<32x16xbf16, #tpu.memory_space<vmem>>, vector<32x16xbf16>
    %cst_33 = arith.constant dense<0.000000e+00> : vector<4x16xf32>
    %76 = tpu.matmul %74, %75, %cst_33 {dimension_numbers = #tpu.dot_dimension_numbers<[1], [0], [0], [1], [0, 0, 1, 1], [], []>} : vector<4x32xbf16>, vector<32x16xbf16>, vector<4x16xf32> -> vector<4x16xf32>
    %77 = vector.extract_strided_slice %72 {offsets = [0, 0], sizes = [1, 16], strides = [1, 1]} : vector<4x16xf32> to vector<1x16xf32>
    %78 = vector.extract_strided_slice %76 {offsets = [2, 0], sizes = [1, 16], strides = [1, 1]} : vector<4x16xf32> to vector<1x16xf32>
    %79 = arith.addf %77, %78 : vector<1x16xf32>
    %80 = vector.extract_strided_slice %72 {offsets = [0, 0], sizes = [1, 16], strides = [1, 1]} : vector<4x16xf32> to vector<1x16xf32>
    %81 = vector.extract_strided_slice %76 {offsets = [3, 0], sizes = [1, 16], strides = [1, 1]} : vector<4x16xf32> to vector<1x16xf32>
    %82 = arith.addf %80, %81 : vector<1x16xf32>
    %83 = vector.extract_strided_slice %72 {offsets = [1, 0], sizes = [1, 16], strides = [1, 1]} : vector<4x16xf32> to vector<1x16xf32>
    %84 = vector.extract_strided_slice %76 {offsets = [2, 0], sizes = [1, 16], strides = [1, 1]} : vector<4x16xf32> to vector<1x16xf32>
    %85 = arith.addf %83, %84 : vector<1x16xf32>
    %86 = vector.extract_strided_slice %72 {offsets = [1, 0], sizes = [1, 16], strides = [1, 1]} : vector<4x16xf32> to vector<1x16xf32>
    %87 = vector.extract_strided_slice %76 {offsets = [3, 0], sizes = [1, 16], strides = [1, 1]} : vector<4x16xf32> to vector<1x16xf32>
    %88 = arith.addf %86, %87 : vector<1x16xf32>
    %cst_34 = arith.constant 0.000000e+00 : f32
    %89 = vector.broadcast %cst_34 : f32 to vector<1x16xf32>
    %cst_35 = arith.constant 0.000000e+00 : f32
    %90 = vector.broadcast %cst_35 : f32 to vector<1x16xf32>
    %cst_36 = arith.constant 0.000000e+00 : f32
    %91 = vector.broadcast %cst_36 : f32 to vector<1x16xf32>
    %cst_37 = arith.constant 0.000000e+00 : f32
    %92 = vector.broadcast %cst_37 : f32 to vector<1x16xf32>
    %93 = tpu.concatenate %79, %82, %85, %88, %89, %90, %91, %92 in 0 : vector<1x16xf32>, vector<1x16xf32>, vector<1x16xf32>, vector<1x16xf32>, vector<1x16xf32>, vector<1x16xf32>, vector<1x16xf32>, vector<1x16xf32> -> vector<8x16xf32>
    %c0_38 = arith.constant 0 : index
    %c0_39 = arith.constant 0 : index
    %94 = vector.load %arg7[%c0_38, %c0_39] : memref<1x16xf32, #tpu.memory_space<vmem>>, vector<1x16xf32>
    %95 = vector.broadcast %94 : vector<1x16xf32> to vector<8x16xf32>
    %96 = arith.addf %93, %95 : vector<8x16xf32>
    %c0_40 = arith.constant 0 : index
    %c0_41 = arith.constant 0 : index
    %97 = vector.load %arg10[%c0_40, %c0_41] : memref<8x16xf32, #tpu.memory_space<vmem>>, vector<8x16xf32>
    tpu.vector_store %arg10[%c0_40, %c0_41], %96 {strides = array<i32>} : memref<8x16xf32, #tpu.memory_space<vmem>>, vector<8x16xf32>,
    return
  }
}

</mosaic_0001>

<llo_original>
// kernel: squeeze.1
$region0: #{squeeze.1}
  %s0 = inlined_call_operand.hbm [shape: f32[1,4,32,32], index: 0, kind: input, shape index: {}]
  %s1 = inlined_call_operand.vmem [shape: f32[4,1024], index: 1, kind: output, shape index: {}]
  $region1: #{squeeze.1} parent=0
    #allocation0 [shape = 'u8[65536]{0}', space=vmem, size = 0x10000, scoped, tag = 'operand span for operand 0']
    #allocation1 [shape = 's32[1]{0}', space=sflag, size = 0x4, scoped, tag = 'scoped memory for squeeze.1']
    #allocation2 [shape = 'u8[32768]{0}', space=vmem, size = 0x8000, scoped, tag = 'scoped mem for output reshape']
    %2 = vsyncpa [#allocation1], 0
    %4 = vsyncadd [#allocation1], 0
    %s6 = sshll.u32 %s0, 4
    %s7 = int_to_ptr.hbm [resolvable:$true] %s6
    %s8 = sshll.u32 [#allocation0], 4
    %s9 = int_to_ptr.vmem [resolvable:$true] %s8
    %11 = dma.hbm_to_vmem [thread:$0]  %s7, 2048, %s9, [#allocation1]
    %13 = dma.done [#allocation1], 2048
    %v14 = vld [vmem:[#allocation0] ss:$4 sm:$0xff]
    %vm15 = vcmask 261120
    %16 = vst.msk [vmem:[#allocation2] ss:$8 sm:$0xf] %vm15, %v14
    %17 = vst.msk [vmem:[#allocation2] ss:$8 sm:$0xf0] %vm15, %v14
    %s18 = scalar_lea.vmem [#allocation0], 32
    %v19 = vld [vmem:[%s18] ss:$4 sm:$0xff]
    %vm20 = vcmask 261120
    %s21 = scalar_lea.vmem [#allocation2], 1
    %22 = vst.msk [vmem:[%s21] ss:$8 sm:$0xf] %vm20, %v19
    %s23 = scalar_lea.vmem [#allocation2], 1
    %24 = vst.msk [vmem:[%s23] ss:$8 sm:$0xf0] %vm20, %v19
    %s25 = scalar_lea.vmem [#allocation0], 64
    %v26 = vld [vmem:[%s25] ss:$4 sm:$0xff]
    %vm27 = vcmask 261120
    %s28 = scalar_lea.vmem [#allocation2], 2
    %29 = vst.msk [vmem:[%s28] ss:$8 sm:$0xf] %vm27, %v26
    %s30 = scalar_lea.vmem [#allocation2], 2
    %31 = vst.msk [vmem:[%s30] ss:$8 sm:$0xf0] %vm27, %v26
    %s32 = scalar_lea.vmem [#allocation0], 96
    %v33 = vld [vmem:[%s32] ss:$4 sm:$0xff]
    %vm34 = vcmask 261120
    %s35 = scalar_lea.vmem [#allocation2], 3
    %36 = vst.msk [vmem:[%s35] ss:$8 sm:$0xf] %vm34, %v33
    %s37 = scalar_lea.vmem [#allocation2], 3
    %38 = vst.msk [vmem:[%s37] ss:$8 sm:$0xf0] %vm34, %v33
    %s39 = scalar_lea.vmem [#allocation0], 3
    %v40 = vld [vmem:[%s39] sm:$0x1]
    %s41 = scalar_lea.vmem [#allocation0], 34
    %v42 = vld [vmem:[%s41] sm:$0x2]
    %vm43 = vcmask 1041409
    %v44 = vsel %vm43, %v42, %v40
    %s45 = scalar_lea.vmem [#allocation0], 65
    %v46 = vld [vmem:[%s45] sm:$0x4]
    %vm47 = vcmask 1042434
    %v48 = vsel %vm47, %v46, %v44
    %s49 = scalar_lea.vmem [#allocation0], 375
    %s50 = smov 24
    %v51 = vld [vmem:[%s49] ss:$-92 sm:%s50]
    %vm52 = vcmask 1044483
    %v53 = vsel %vm52, %v51, %v48
    %s54 = scalar_lea.vmem [#allocation0], 34
    %v55 = vld [vmem:[%s54] sm:$0x20]
    %vm56 = vcmask 1045509
    %v57 = vsel %vm56, %v55, %v53
    %s58 = scalar_lea.vmem [#allocation0], 65
    %v59 = vld [vmem:[%s58] sm:$0x40]
    %vm60 = vcmask 1046534
    %v61 = vsel %vm60, %v59, %v57
    %s62 = scalar_lea.vmem [#allocation0], 96
    %v63 = vld [vmem:[%s62] sm:$0x80]
    %vm64 = vcmask 1047559
    %v65 = vsel %vm64, %v63, %v61
    %66 = vrot.lane.b32.xlu0 %v65, 96
    %v67 = vpop.permute.xlu0 %66
    %vm68 = vcmask 1048320
    %69 = vst.msk [vmem:[#allocation2] sm:$0xf] %vm68, %v67
    %s70 = scalar_lea.vmem [#allocation2], 4
    %71 = vst.msk [vmem:[%s70] sm:$0xf0] %vm68, %v67
    %s72 = scalar_lea.vmem [#allocation0], 19
    %v73 = vld [vmem:[%s72] sm:$0x1]
    %s74 = scalar_lea.vmem [#allocation0], 50
    %v75 = vld [vmem:[%s74] sm:$0x2]
    %vm76 = vcmask 1041409
    %v77 = vsel %vm76, %v75, %v73
    %s78 = scalar_lea.vmem [#allocation0], 81
    %v79 = vld [vmem:[%s78] sm:$0x4]
    %vm80 = vcmask 1042434
    %v81 = vsel %vm80, %v79, %v77
    %s82 = scalar_lea.vmem [#allocation0], 391
    %s83 = smov 24
    %v84 = vld [vmem:[%s82] ss:$-92 sm:%s83]
    %vm85 = vcmask 1044483
    %v86 = vsel %vm85, %v84, %v81
    %s87 = scalar_lea.vmem [#allocation0], 50
    %v88 = vld [vmem:[%s87] sm:$0x20]
    %vm89 = vcmask 1045509
    %v90 = vsel %vm89, %v88, %v86
    %s91 = scalar_lea.vmem [#allocation0], 81
    %v92 = vld [vmem:[%s91] sm:$0x40]
    %vm93 = vcmask 1046534
    %v94 = vsel %vm93, %v92, %v90
    %s95 = scalar_lea.vmem [#allocation0], 112
    %v96 = vld [vmem:[%s95] sm:$0x80]
    %vm97 = vcmask 1047559
    %v98 = vsel %vm97, %v96, %v94
    %99 = vrot.lane.b32.xlu0 %v98, 96
    %v100 = vpop.permute.xlu0 %99
    %vm101 = vcmask 1048320
    %s102 = scalar_lea.vmem [#allocation2], 32
    %103 = vst.msk [vmem:[%s102] sm:$0xf] %vm101, %v100
    %s104 = scalar_lea.vmem [#allocation2], 36
    %105 = vst.msk [vmem:[%s104] sm:$0xf0] %vm101, %v100
    %s106 = scalar_lea.vmem [#allocation0], 11
    %v107 = vld [vmem:[%s106] sm:$0x1]
    %s108 = scalar_lea.vmem [#allocation0], 42
    %v109 = vld [vmem:[%s108] sm:$0x2]
    %vm110 = vcmask 1041409
    %v111 = vsel %vm110, %v109, %v107
    %s112 = scalar_lea.vmem [#allocation0], 73
    %v113 = vld [vmem:[%s112] sm:$0x4]
    %vm114 = vcmask 1042434
    %v115 = vsel %vm114, %v113, %v111
    %s116 = scalar_lea.vmem [#allocation0], 383
    %s117 = smov 24
    %v118 = vld [vmem:[%s116] ss:$-92 sm:%s117]
    %vm119 = vcmask 1044483
    %v120 = vsel %vm119, %v118, %v115
    %s121 = scalar_lea.vmem [#allocation0], 42
    %v122 = vld [vmem:[%s121] sm:$0x20]
    %vm123 = vcmask 1045509
    %v124 = vsel %vm123, %v122, %v120
    %s125 = scalar_lea.vmem [#allocation0], 73
    %v126 = vld [vmem:[%s125] sm:$0x40]
    %vm127 = vcmask 1046534
    %v128 = vsel %vm127, %v126, %v124
    %s129 = scalar_lea.vmem [#allocation0], 104
    %v130 = vld [vmem:[%s129] sm:$0x80]
    %vm131 = vcmask 1047559
    %v132 = vsel %vm131, %v130, %v128
    %133 = vrot.lane.b32.xlu0 %v132, 96
    %v134 = vpop.permute.xlu0 %133
    %vm135 = vcmask 1048320
    %s136 = scalar_lea.vmem [#allocation2], 16
    %137 = vst.msk [vmem:[%s136] sm:$0xf] %vm135, %v134
    %s138 = scalar_lea.vmem [#allocation2], 20
    %139 = vst.msk [vmem:[%s138] sm:$0xf0] %vm135, %v134
    %s140 = scalar_lea.vmem [#allocation0], 27
    %v141 = vld [vmem:[%s140] sm:$0x1]
    %s142 = scalar_lea.vmem [#allocation0], 58
    %v143 = vld [vmem:[%s142] sm:$0x2]
    %vm144 = vcmask 1041409
    %v145 = vsel %vm144, %v143, %v141
    %s146 = scalar_lea.vmem [#allocation0], 89
    %v147 = vld [vmem:[%s146] sm:$0x4]
    %vm148 = vcmask 1042434
    %v149 = vsel %vm148, %v147, %v145
    %s150 = scalar_lea.vmem [#allocation0], 399
    %s151 = smov 24
    %v152 = vld [vmem:[%s150] ss:$-92 sm:%s151]
    %vm153 = vcmask 1044483
    %v154 = vsel %vm153, %v152, %v149
    %s155 = scalar_lea.vmem [#allocation0], 58
    %v156 = vld [vmem:[%s155] sm:$0x20]
    %vm157 = vcmask 1045509
    %v158 = vsel %vm157, %v156, %v154
    %s159 = scalar_lea.vmem [#allocation0], 89
    %v160 = vld [vmem:[%s159] sm:$0x40]
    %vm161 = vcmask 1046534
    %v162 = vsel %vm161, %v160, %v158
    %s163 = scalar_lea.vmem [#allocation0], 120
    %v164 = vld [vmem:[%s163] sm:$0x80]
    %vm165 = vcmask 1047559
    %v166 = vsel %vm165, %v164, %v162
    %167 = vrot.lane.b32.xlu0 %v166, 96
    %v168 = vpop.permute.xlu0 %167
    %vm169 = vcmask 1048320
    %s170 = scalar_lea.vmem [#allocation2], 48
    %171 = vst.msk [vmem:[%s170] sm:$0xf] %vm169, %v168
    %s172 = scalar_lea.vmem [#allocation2], 52
    %173 = vst.msk [vmem:[%s172] sm:$0xf0] %vm169, %v168
    %s174 = scalar_lea.vmem [#allocation0], 2
    %v175 = vld [vmem:[%s174] sm:$0x1]
    %s176 = scalar_lea.vmem [#allocation0], 33
    %v177 = vld [vmem:[%s176] sm:$0x2]
    %vm178 = vcmask 1041409
    %v179 = vsel %vm178, %v177, %v175
    %s180 = scalar_lea.vmem [#allocation0], 64
    %v181 = vld [vmem:[%s180] sm:$0x4]
    %vm182 = vcmask 1042434
    %v183 = vsel %vm182, %v181, %v179
    %s184 = scalar_lea.vmem [#allocation0], 374
    %s185 = smov 24
    %v186 = vld [vmem:[%s184] ss:$-92 sm:%s185]
    %vm187 = vcmask 1044483
    %v188 = vsel %vm187, %v186, %v183
    %s189 = scalar_lea.vmem [#allocation0], 33
    %v190 = vld [vmem:[%s189] sm:$0x20]
    %vm191 = vcmask 1045509
    %v192 = vsel %vm191, %v190, %v188
    %s193 = scalar_lea.vmem [#allocation0], 64
    %v194 = vld [vmem:[%s193] sm:$0x40]
    %vm195 = vcmask 1046534
    %v196 = vsel %vm195, %v194, %v192
    %s197 = scalar_lea.vmem [#allocation0], 95
    %v198 = vld [vmem:[%s197] sm:$0x80]
    %vm199 = vcmask 1047559
    %v200 = vsel %vm199, %v198, %v196
    %201 = vrot.lane.b32.xlu0 %v200, 64
    %v202 = vpop.permute.xlu0 %201
    %vm203 = vcmask 785920
    %204 = vst.msk [vmem:[#allocation2] sm:$0xf] %vm203, %v202
    %s205 = scalar_lea.vmem [#allocation2], 4
    %206 = vst.msk [vmem:[%s205] sm:$0xf0] %vm203, %v202
    %s207 = scalar_lea.vmem [#allocation0], 18
    %v208 = vld [vmem:[%s207] sm:$0x1]
    %s209 = scalar_lea.vmem [#allocation0], 49
    %v210 = vld [vmem:[%s209] sm:$0x2]
    %vm211 = vcmask 1041409
    %v212 = vsel %vm211, %v210, %v208
    %s213 = scalar_lea.vmem [#allocation0], 80
    %v214 = vld [vmem:[%s213] sm:$0x4]
    %vm215 = vcmask 1042434
    %v216 = vsel %vm215, %v214, %v212
    %s217 = scalar_lea.vmem [#allocation0], 390
    %s218 = smov 24
    %v219 = vld [vmem:[%s217] ss:$-92 sm:%s218]
    %vm220 = vcmask 1044483
    %v221 = vsel %vm220, %v219, %v216
    %s222 = scalar_lea.vmem [#allocation0], 49
    %v223 = vld [vmem:[%s222] sm:$0x20]
    %vm224 = vcmask 1045509
    %v225 = vsel %vm224, %v223, %v221
    %s226 = scalar_lea.vmem [#allocation0], 80
    %v227 = vld [vmem:[%s226] sm:$0x40]
    %vm228 = vcmask 1046534
    %v229 = vsel %vm228, %v227, %v225
    %s230 = scalar_lea.vmem [#allocation0], 111
    %v231 = vld [vmem:[%s230] sm:$0x80]
    %vm232 = vcmask 1047559
    %v233 = vsel %vm232, %v231, %v229
    %234 = vrot.lane.b32.xlu0 %v233, 64
    %v235 = vpop.permute.xlu0 %234
    %vm236 = vcmask 785920
    %s237 = scalar_lea.vmem [#allocation2], 32
    %238 = vst.msk [vmem:[%s237] sm:$0xf] %vm236, %v235
    %s239 = scalar_lea.vmem [#allocation2], 36
    %240 = vst.msk [vmem:[%s239] sm:$0xf0] %vm236, %v235
    %s241 = scalar_lea.vmem [#allocation0], 10
    %v242 = vld [vmem:[%s241] sm:$0x1]
    %s243 = scalar_lea.vmem [#allocation0], 41
    %v244 = vld [vmem:[%s243] sm:$0x2]
    %vm245 = vcmask 1041409
    %v246 = vsel %vm245, %v244, %v242
    %s247 = scalar_lea.vmem [#allocation0], 72
    %v248 = vld [vmem:[%s247] sm:$0x4]
    %vm249 = vcmask 1042434
    %v250 = vsel %vm249, %v248, %v246
    %s251 = scalar_lea.vmem [#allocation0], 382
    %s252 = smov 24
    %v253 = vld [vmem:[%s251] ss:$-92 sm:%s252]
    %vm254 = vcmask 1044483
    %v255 = vsel %vm254, %v253, %v250
    %s256 = scalar_lea.vmem [#allocation0], 41
    %v257 = vld [vmem:[%s256] sm:$0x20]
    %vm258 = vcmask 1045509
    %v259 = vsel %vm258, %v257, %v255
    %s260 = scalar_lea.vmem [#allocation0], 72
    %v261 = vld [vmem:[%s260] sm:$0x40]
    %vm262 = vcmask 1046534
    %v263 = vsel %vm262, %v261, %v259
    %s264 = scalar_lea.vmem [#allocation0], 103
    %v265 = vld [vmem:[%s264] sm:$0x80]
    %vm266 = vcmask 1047559
    %v267 = vsel %vm266, %v265, %v263
    %268 = vrot.lane.b32.xlu0 %v267, 64
    %v269 = vpop.permute.xlu0 %268
    %vm270 = vcmask 785920
    %s271 = scalar_lea.vmem [#allocation2], 16
    %272 = vst.msk [vmem:[%s271] sm:$0xf] %vm270, %v269
    %s273 = scalar_lea.vmem [#allocation2], 20
    %274 = vst.msk [vmem:[%s273] sm:$0xf0] %vm270, %v269
    %s275 = scalar_lea.vmem [#allocation0], 26
    %v276 = vld [vmem:[%s275] sm:$0x1]
    %s277 = scalar_lea.vmem [#allocation0], 57
    %v278 = vld [vmem:[%s277] sm:$0x2]
    %vm279 = vcmask 1041409
    %v280 = vsel %vm279, %v278, %v276
    %s281 = scalar_lea.vmem [#allocation0], 88
    %v282 = vld [vmem:[%s281] sm:$0x4]
    %vm283 = vcmask 1042434
    %v284 = vsel %vm283, %v282, %v280
    %s285 = scalar_lea.vmem [#allocation0], 398
    %s286 = smov 24
    %v287 = vld [vmem:[%s285] ss:$-92 sm:%s286]
    %vm288 = vcmask 1044483
    %v289 = vsel %vm288, %v287, %v284
    %s290 = scalar_lea.vmem [#allocation0], 57
    %v291 = vld [vmem:[%s290] sm:$0x20]
    %vm292 = vcmask 1045509
    %v293 = vsel %vm292, %v291, %v289
    %s294 = scalar_lea.vmem [#allocation0], 88
    %v295 = vld [vmem:[%s294] sm:$0x40]
    %vm296 = vcmask 1046534
    %v297 = vsel %vm296, %v295, %v293
    %s298 = scalar_lea.vmem [#allocation0], 119
    %v299 = vld [vmem:[%s298] sm:$0x80]
    %vm300 = vcmask 1047559
    %v301 = vsel %vm300, %v299, %v297
    %302 = vrot.lane.b32.xlu0 %v301, 64
    %v303 = vpop.permute.xlu0 %302
    %vm304 = vcmask 785920
    %s305 = scalar_lea.vmem [#allocation2], 48
    %306 = vst.msk [vmem:[%s305] sm:$0xf] %vm304, %v303
    %s307 = scalar_lea.vmem [#allocation2], 52
    %308 = vst.msk [vmem:[%s307] sm:$0xf0] %vm304, %v303
    %s309 = scalar_lea.vmem [#allocation0], 1
    %v310 = vld [vmem:[%s309] sm:$0x1]
    %s311 = scalar_lea.vmem [#allocation0], 32
    %v312 = vld [vmem:[%s311] sm:$0x2]
    %vm313 = vcmask 1041409
    %v314 = vsel %vm313, %v312, %v310
    %s315 = scalar_lea.vmem [#allocation0], 63
    %v316 = vld [vmem:[%s315] sm:$0x4]
    %vm317 = vcmask 1042434
    %v318 = vsel %vm317, %v316, %v314
    %s319 = scalar_lea.vmem [#allocation0], 373
    %s320 = smov 24
    %v321 = vld [vmem:[%s319] ss:$-92 sm:%s320]
    %vm322 = vcmask 1044483
    %v323 = vsel %vm322, %v321, %v318
    %s324 = scalar_lea.vmem [#allocation0], 32
    %v325 = vld [vmem:[%s324] sm:$0x20]
    %vm326 = vcmask 1045509
    %v327 = vsel %vm326, %v325, %v323
    %s328 = scalar_lea.vmem [#allocation0], 63
    %v329 = vld [vmem:[%s328] sm:$0x40]
    %vm330 = vcmask 1046534
    %v331 = vsel %vm330, %v329, %v327
    %s332 = scalar_lea.vmem [#allocation0], 94
    %v333 = vld [vmem:[%s332] sm:$0x80]
    %vm334 = vcmask 1047559
    %v335 = vsel %vm334, %v333, %v331
    %336 = vrot.lane.b32.xlu0 %v335, 32
    %v337 = vpop.permute.xlu0 %336
    %vm338 = vcmask 523520
    %339 = vst.msk [vmem:[#allocation2] sm:$0xf] %vm338, %v337
    %s340 = scalar_lea.vmem [#allocation2], 4
    %341 = vst.msk [vmem:[%s340] sm:$0xf0] %vm338, %v337
    %s342 = scalar_lea.vmem [#allocation0], 17
    %v343 = vld [vmem:[%s342] sm:$0x1]
    %s344 = scalar_lea.vmem [#allocation0], 48
    %v345 = vld [vmem:[%s344] sm:$0x2]
    %vm346 = vcmask 1041409
    %v347 = vsel %vm346, %v345, %v343
    %s348 = scalar_lea.vmem [#allocation0], 79
    %v349 = vld [vmem:[%s348] sm:$0x4]
    %vm350 = vcmask 1042434
    %v351 = vsel %vm350, %v349, %v347
    %s352 = scalar_lea.vmem [#allocation0], 389
    %s353 = smov 24
    %v354 = vld [vmem:[%s352] ss:$-92 sm:%s353]
    %vm355 = vcmask 1044483
    %v356 = vsel %vm355, %v354, %v351
    %s357 = scalar_lea.vmem [#allocation0], 48
    %v358 = vld [vmem:[%s357] sm:$0x20]
    %vm359 = vcmask 1045509
    %v360 = vsel %vm359, %v358, %v356
    %s361 = scalar_lea.vmem [#allocation0], 79
    %v362 = vld [vmem:[%s361] sm:$0x40]
    %vm363 = vcmask 1046534
    %v364 = vsel %vm363, %v362, %v360
    %s365 = scalar_lea.vmem [#allocation0], 110
    %v366 = vld [vmem:[%s365] sm:$0x80]
    %vm367 = vcmask 1047559
    %v368 = vsel %vm367, %v366, %v364
    %369 = vrot.lane.b32.xlu0 %v368, 32
    %v370 = vpop.permute.xlu0 %369
    %vm371 = vcmask 523520
    %s372 = scalar_lea.vmem [#allocation2], 32
    %373 = vst.msk [vmem:[%s372] sm:$0xf] %vm371, %v370
    %s374 = scalar_lea.vmem [#allocation2], 36
    %375 = vst.msk [vmem:[%s374] sm:$0xf0] %vm371, %v370
    %s376 = scalar_lea.vmem [#allocation0], 9
    %v377 = vld [vmem:[%s376] sm:$0x1]
    %s378 = scalar_lea.vmem [#allocation0], 40
    %v379 = vld [vmem:[%s378] sm:$0x2]
    %vm380 = vcmask 1041409
    %v381 = vsel %vm380, %v379, %v377
    %s382 = scalar_lea.vmem [#allocation0], 71
    %v383 = vld [vmem:[%s382] sm:$0x4]
    %vm384 = vcmask 1042434
    %v385 = vsel %vm384, %v383, %v381
    %s386 = scalar_lea.vmem [#allocation0], 381
    %s387 = smov 24
    %v388 = vld [vmem:[%s386] ss:$-92 sm:%s387]
    %vm389 = vcmask 1044483
    %v390 = vsel %vm389, %v388, %v385
    %s391 = scalar_lea.vmem [#allocation0], 40
    %v392 = vld [vmem:[%s391] sm:$0x20]
    %vm393 = vcmask 1045509
    %v394 = vsel %vm393, %v392, %v390
    %s395 = scalar_lea.vmem [#allocation0], 71
    %v396 = vld [vmem:[%s395] sm:$0x40]
    %vm397 = vcmask 1046534
    %v398 = vsel %vm397, %v396, %v394
    %s399 = scalar_lea.vmem [#allocation0], 102
    %v400 = vld [vmem:[%s399] sm:$0x80]
    %vm401 = vcmask 1047559
    %v402 = vsel %vm401, %v400, %v398
    %403 = vrot.lane.b32.xlu0 %v402, 32
    %v404 = vpop.permute.xlu0 %403
    %vm405 = vcmask 523520
    %s406 = scalar_lea.vmem [#allocation2], 16
    %407 = vst.msk [vmem:[%s406] sm:$0xf] %vm405, %v404
    %s408 = scalar_lea.vmem [#allocation2], 20
    %409 = vst.msk [vmem:[%s408] sm:$0xf0] %vm405, %v404
    %s410 = scalar_lea.vmem [#allocation0], 25
    %v411 = vld [vmem:[%s410] sm:$0x1]
    %s412 = scalar_lea.vmem [#allocation0], 56
    %v413 = vld [vmem:[%s412] sm:$0x2]
    %vm414 = vcmask 1041409
    %v415 = vsel %vm414, %v413, %v411
    %s416 = scalar_lea.vmem [#allocation0], 87
    %v417 = vld [vmem:[%s416] sm:$0x4]
    %vm418 = vcmask 1042434
    %v419 = vsel %vm418, %v417, %v415
    %s420 = scalar_lea.vmem [#allocation0], 397
    %s421 = smov 24
    %v422 = vld [vmem:[%s420] ss:$-92 sm:%s421]
    %vm423 = vcmask 1044483
    %v424 = vsel %vm423, %v422, %v419
    %s425 = scalar_lea.vmem [#allocation0], 56
    %v426 = vld [vmem:[%s425] sm:$0x20]
    %vm427 = vcmask 1045509
    %v428 = vsel %vm427, %v426, %v424
    %s429 = scalar_lea.vmem [#allocation0], 87
    %v430 = vld [vmem:[%s429] sm:$0x40]
    %vm431 = vcmask 1046534
    %v432 = vsel %vm431, %v430, %v428
    %s433 = scalar_lea.vmem [#allocation0], 118
    %v434 = vld [vmem:[%s433] sm:$0x80]
    %vm435 = vcmask 1047559
    %v436 = vsel %vm435, %v434, %v432
    %437 = vrot.lane.b32.xlu0 %v436, 32
    %v438 = vpop.permute.xlu0 %437
    %vm439 = vcmask 523520
    %s440 = scalar_lea.vmem [#allocation2], 48
    %441 = vst.msk [vmem:[%s440] sm:$0xf] %vm439, %v438
    %s442 = scalar_lea.vmem [#allocation2], 52
    %443 = vst.msk [vmem:[%s442] sm:$0xf0] %vm439, %v438
    %s445 = ssub.s32 16, 1
    %v446 = vld [vmem:[#allocation2] sm:%s445]
    %s448 = ssub.s32 16, 1
    %449 = vst [vmem:[%s1] sm:%s448] %v446
    %s450 = scalar_lea.vmem [#allocation2], 8
    %v451 = vld [vmem:[%s450] sm:%s445]
    %s453 = ssub.s32 16, 1
    %s454 = scalar_lea.vmem %s1, 4
    %455 = vst [vmem:[%s454] sm:%s453] %v451
    %s456 = scalar_lea.vmem [#allocation2], 16
    %v457 = vld [vmem:[%s456] sm:%s445]
    %s459 = ssub.s32 16, 1
    %s460 = scalar_lea.vmem %s1, 8
    %461 = vst [vmem:[%s460] sm:%s459] %v457
    %s462 = scalar_lea.vmem [#allocation2], 24
    %v463 = vld [vmem:[%s462] sm:%s445]
    %s465 = ssub.s32 16, 1
    %s466 = scalar_lea.vmem %s1, 12
    %467 = vst [vmem:[%s466] sm:%s465] %v463
    %s468 = scalar_lea.vmem [#allocation2], 32
    %v469 = vld [vmem:[%s468] sm:%s445]
    %s471 = ssub.s32 16, 1
    %s472 = scalar_lea.vmem %s1, 16
    %473 = vst [vmem:[%s472] sm:%s471] %v469
    %s474 = scalar_lea.vmem [#allocation2], 40
    %v475 = vld [vmem:[%s474] sm:%s445]
    %s477 = ssub.s32 16, 1
    %s478 = scalar_lea.vmem %s1, 20
    %479 = vst [vmem:[%s478] sm:%s477] %v475
    %s480 = scalar_lea.vmem [#allocation2], 48
    %v481 = vld [vmem:[%s480] sm:%s445]
    %s483 = ssub.s32 16, 1
    %s484 = scalar_lea.vmem %s1, 24
    %485 = vst [vmem:[%s484] sm:%s483] %v481
    %s486 = scalar_lea.vmem [#allocation2], 56
    %v487 = vld [vmem:[%s486] sm:%s445]
    %s489 = ssub.s32 16, 1
    %s490 = scalar_lea.vmem %s1, 28
    %491 = vst [vmem:[%s490] sm:%s489] %v487
    %492 = vsyncpa [#allocation1], 1

// kernel: _device_forward.1
$region0: #{_device_forward.1}
  #allocation0 [shape = 'u32[]', space=smem, size = 0x4, offset = 0x4, fixed_abs, tag = 'smem constant byte address 0x4 - core index']
  #allocation1 [shape = 'u32[72,128]{1,0:T(1,128)}', space=vmem, size = 0x9000, scoped, tag = 'internal scratch']
  %s0 = inlined_call_operand.vmem [shape: f32[4,1024], index: 0, kind: input, shape index: {}]
  %s1 = inlined_call_operand.vmem [shape: f32[32,4], index: 1, kind: input, shape index: {}]
  %s2 = inlined_call_operand.vmem [shape: f32[32,1], index: 2, kind: input, shape index: {}]
  %s3 = inlined_call_operand.vmem [shape: f32[4,32], index: 3, kind: input, shape index: {}]
  %s4 = inlined_call_operand.vmem [shape: f32[4,1], index: 4, kind: input, shape index: {}]
  %s5 = inlined_call_operand.vmem [shape: bf16[32,16], index: 5, kind: input, shape index: {}]
  %s6 = inlined_call_operand.vmem [shape: bf16[32,16], index: 6, kind: input, shape index: {}]
  %s7 = inlined_call_operand.vmem [shape: f32[1,16], index: 7, kind: input, shape index: {}]
  %s8 = inlined_call_operand.hbm [shape: f32[4,1024], index: 8, kind: output, shape index: {0}]
  %s9 = inlined_call_operand.vmem [shape: f32[4,1], index: 9, kind: output, shape index: {1}]
  %s10 = inlined_call_operand.hbm [shape: f32[8,16], index: 10, kind: output, shape index: {2}]
  %11 = xla_tuple %s8, %s9, %s10
  %s12 = sld [smem:[#allocation0]]
  $region58: #{_device_forward.1} parent=0
    _
  %s14 = ssub.s32 1, %s12
  %s15 = scalar_select 0, %s14, %s12
  $region1: #{_device_forward.1} parent=0
    #allocation2 [shape = 'u8[16384]{0}', space=vmem, size = 0x4000, scoped, tag = 'output window, operand 0, single buffered']
    #allocation3 [shape = 's32[1]{0}', space=sflag, size = 0x4, scoped, tag = 'scoped memory for _device_forward.1']
    #allocation4 [shape = 'u8[4096]{0}', space=vmem, size = 0x1000, scoped, tag = 'output window, operand 2, single buffered']
    #allocation5 [shape = 's32[1]{0}', space=sflag, size = 0x4, scoped, tag = 'scoped memory for _device_forward.1']
    %16 = vsyncpa [#allocation3], 0
    %17 = vsyncpa [#allocation5], 0
    // Predicated region
    $region2: #{_device_forward.1} parent=1 // pred_check
      _
    $region3: #{_device_forward.1} parent=1 // pred_check_branch
      %19 = sbr.rel (0) target = $region5
    $region4: #{_device_forward.1} parent=1 // pred_region
      _
    $region5: #{_device_forward.1} parent=1 // pred_fallthru
      _
    // Predicated region
    $region6: #{_device_forward.1} parent=1 // pred_check
      _
    $region7: #{_device_forward.1} parent=1 // pred_check_branch
      %21 = sbr.rel (0) target = $region9
    $region8: #{_device_forward.1} parent=1 // pred_region
      _
    $region9: #{_device_forward.1} parent=1 // pred_fallthru
      _
    // Predicated region
    $region10: #{_device_forward.1} parent=1 // pred_check
      _
    $region11: #{_device_forward.1} parent=1 // pred_check_branch
      %23 = sbr.rel (0) target = $region13
    $region12: #{_device_forward.1} parent=1 // pred_region
      _
    $region13: #{_device_forward.1} parent=1 // pred_fallthru
      _
    // Predicated region
    $region14: #{_device_forward.1} parent=1 // pred_check
      _
    $region15: #{_device_forward.1} parent=1 // pred_check_branch
      %25 = sbr.rel (0) target = $region17
    $region16: #{_device_forward.1} parent=1 // pred_region
      _
    $region17: #{_device_forward.1} parent=1 // pred_fallthru
      _
    // Predicated region
    $region18: #{_device_forward.1} parent=1 // pred_check
      _
    $region19: #{_device_forward.1} parent=1 // pred_check_branch
      %27 = sbr.rel (0) target = $region21
    $region20: #{_device_forward.1} parent=1 // pred_region
      _
    $region21: #{_device_forward.1} parent=1 // pred_fallthru
      _
    // Predicated region
    $region22: #{_device_forward.1} parent=1 // pred_check
      _
    $region23: #{_device_forward.1} parent=1 // pred_check_branch
      %29 = sbr.rel (0) target = $region25
    $region24: #{_device_forward.1} parent=1 // pred_region
      _
    $region25: #{_device_forward.1} parent=1 // pred_fallthru
      _
    // Predicated region
    $region26: #{_device_forward.1} parent=1 // pred_check
      _
    $region27: #{_device_forward.1} parent=1 // pred_check_branch
      %31 = sbr.rel (0) target = $region29
    $region28: #{_device_forward.1} parent=1 // pred_region
      _
    $region29: #{_device_forward.1} parent=1 // pred_fallthru
      _
    // Predicated region
    $region30: #{_device_forward.1} parent=1 // pred_check
      _
    $region31: #{_device_forward.1} parent=1 // pred_check_branch
      %33 = sbr.rel (0) target = $region33
    $region32: #{_device_forward.1} parent=1 // pred_region
      _
    $region33: #{_device_forward.1} parent=1 // pred_fallthru
      _
    %v35 = vld [vmem:[%s0] sm:$0xff]
    %v36 = vld [vmem:[%s0 + $0x8] sm:$0xff]
    %v37 = vld [vmem:[%s0 + $0x10] sm:$0xff]
    %v38 = vld [vmem:[%s0 + $0x18] sm:$0xff]
    %v39 = vld [vmem:[%s1] sm:$0xff]
    %v40 = vld [vmem:[%s1 + $0x8] sm:$0xff]
    %v41 = vld [vmem:[%s1 + $0x10] sm:$0xff]
    %v42 = vld [vmem:[%s1 + $0x18] sm:$0xff]
    %v43 = vld [vmem:[%s2] sm:$0xff]
    %v44 = vld [vmem:[%s2 + $0x8] sm:$0xff]
    %v45 = vld [vmem:[%s2 + $0x10] sm:$0xff]
    %v46 = vld [vmem:[%s2 + $0x18] sm:$0xff]
    %48 = vset.pattern.permute.xlu0 0
    %49 = vperm.xlu0 %48, %v39
    %v50 = vpop.permute.xlu0 %49
    %53 = vset.pattern.permute.xlu0 0
    %54 = vperm.xlu0 %53, %v40
    %v55 = vpop.permute.xlu0 %54
    %58 = vset.pattern.permute.xlu0 0
    %59 = vperm.xlu0 %58, %v41
    %v60 = vpop.permute.xlu0 %59
    %63 = vset.pattern.permute.xlu0 0
    %64 = vperm.xlu0 %63, %v42
    %v65 = vpop.permute.xlu0 %64
    %v71 = vperm.slane %v35, 0
    %v72 = vperm.slane %v35, 4
    %v73 = vperm.slane %v36, 0
    %v74 = vperm.slane %v36, 4
    %v75 = vperm.slane %v37, 0
    %v76 = vperm.slane %v37, 4
    %v77 = vperm.slane %v38, 0
    %v78 = vperm.slane %v38, 4
    %v87 = vperm.slane %v71, 0
    %v88 = vperm.slane %v72, 0
    %v89 = vperm.slane %v73, 0
    %v90 = vperm.slane %v74, 0
    %v91 = vperm.slane %v75, 0
    %v92 = vperm.slane %v76, 0
    %v93 = vperm.slane %v77, 0
    %v94 = vperm.slane %v78, 0
    %v95 = vmul.f32 %v50, %v87
    %v96 = vmul.f32 %v50, %v88
    %v97 = vmul.f32 %v50, %v89
    %v98 = vmul.f32 %v50, %v90
    %v99 = vmul.f32 %v50, %v91
    %v100 = vmul.f32 %v50, %v92
    %v101 = vmul.f32 %v50, %v93
    %v102 = vmul.f32 %v50, %v94
    %v103 = vmul.f32 %v55, %v87
    %v104 = vmul.f32 %v55, %v88
    %v105 = vmul.f32 %v55, %v89
    %v106 = vmul.f32 %v55, %v90
    %v107 = vmul.f32 %v55, %v91
    %v108 = vmul.f32 %v55, %v92
    %v109 = vmul.f32 %v55, %v93
    %v110 = vmul.f32 %v55, %v94
    %v111 = vmul.f32 %v60, %v87
    %v112 = vmul.f32 %v60, %v88
    %v113 = vmul.f32 %v60, %v89
    %v114 = vmul.f32 %v60, %v90
    %v115 = vmul.f32 %v60, %v91
    %v116 = vmul.f32 %v60, %v92
    %v117 = vmul.f32 %v60, %v93
    %v118 = vmul.f32 %v60, %v94
    %v119 = vmul.f32 %v65, %v87
    %v120 = vmul.f32 %v65, %v88
    %v121 = vmul.f32 %v65, %v89
    %v122 = vmul.f32 %v65, %v90
    %v123 = vmul.f32 %v65, %v91
    %v124 = vmul.f32 %v65, %v92
    %v125 = vmul.f32 %v65, %v93
    %v126 = vmul.f32 %v65, %v94
    %128 = vset.pattern.permute.xlu0 0
    %129 = vperm.xlu0 %128, %v43
    %v130 = vpop.permute.xlu0 %129
    %133 = vset.pattern.permute.xlu0 0
    %134 = vperm.xlu0 %133, %v44
    %v135 = vpop.permute.xlu0 %134
    %138 = vset.pattern.permute.xlu0 0
    %139 = vperm.xlu0 %138, %v45
    %v140 = vpop.permute.xlu0 %139
    %143 = vset.pattern.permute.xlu0 0
    %144 = vperm.xlu0 %143, %v46
    %v145 = vpop.permute.xlu0 %144
    %v147 = vadd.f32 %v130, %v95
    %v148 = vadd.f32 %v130, %v96
    %v149 = vadd.f32 %v130, %v97
    %v150 = vadd.f32 %v130, %v98
    %v151 = vadd.f32 %v130, %v99
    %v152 = vadd.f32 %v130, %v100
    %v153 = vadd.f32 %v130, %v101
    %v154 = vadd.f32 %v130, %v102
    %v155 = vadd.f32 %v135, %v103
    %v156 = vadd.f32 %v135, %v104
    %v157 = vadd.f32 %v135, %v105
    %v158 = vadd.f32 %v135, %v106
    %v159 = vadd.f32 %v135, %v107
    %v160 = vadd.f32 %v135, %v108
    %v161 = vadd.f32 %v135, %v109
    %v162 = vadd.f32 %v135, %v110
    %v163 = vadd.f32 %v140, %v111
    %v164 = vadd.f32 %v140, %v112
    %v165 = vadd.f32 %v140, %v113
    %v166 = vadd.f32 %v140, %v114
    %v167 = vadd.f32 %v140, %v115
    %v168 = vadd.f32 %v140, %v116
    %v169 = vadd.f32 %v140, %v117
    %v170 = vadd.f32 %v140, %v118
    %v171 = vadd.f32 %v145, %v119
    %v172 = vadd.f32 %v145, %v120
    %v173 = vadd.f32 %v145, %v121
    %v174 = vadd.f32 %v145, %v122
    %v175 = vadd.f32 %v145, %v123
    %v176 = vadd.f32 %v145, %v124
    %v177 = vadd.f32 %v145, %v125
    %v178 = vadd.f32 %v145, %v126
    %179 = vset.pattern.permute.xlu0 1
    %180 = vperm.xlu0 %179, %v39
    %v181 = vpop.permute.xlu0 %180
    %183 = vset.pattern.permute.xlu0 1
    %184 = vperm.xlu0 %183, %v40
    %v185 = vpop.permute.xlu0 %184
    %187 = vset.pattern.permute.xlu0 1
    %188 = vperm.xlu0 %187, %v41
    %v189 = vpop.permute.xlu0 %188
    %191 = vset.pattern.permute.xlu0 1
    %192 = vperm.xlu0 %191, %v42
    %v193 = vpop.permute.xlu0 %192
    %v195 = vperm.slane %v35, 1
    %v196 = vperm.slane %v35, 5
    %v197 = vperm.slane %v36, 1
    %v198 = vperm.slane %v36, 5
    %v199 = vperm.slane %v37, 1
    %v200 = vperm.slane %v37, 5
    %v201 = vperm.slane %v38, 1
    %v202 = vperm.slane %v38, 5
    %v211 = vperm.slane %v195, 1
    %v212 = vperm.slane %v196, 1
    %v213 = vperm.slane %v197, 1
    %v214 = vperm.slane %v198, 1
    %v215 = vperm.slane %v199, 1
    %v216 = vperm.slane %v200, 1
    %v217 = vperm.slane %v201, 1
    %v218 = vperm.slane %v202, 1
    %v219 = vmul.f32 %v181, %v211
    %v220 = vmul.f32 %v181, %v212
    %v221 = vmul.f32 %v181, %v213
    %v222 = vmul.f32 %v181, %v214
    %v223 = vmul.f32 %v181, %v215
    %v224 = vmul.f32 %v181, %v216
    %v225 = vmul.f32 %v181, %v217
    %v226 = vmul.f32 %v181, %v218
    %v227 = vmul.f32 %v185, %v211
    %v228 = vmul.f32 %v185, %v212
    %v229 = vmul.f32 %v185, %v213
    %v230 = vmul.f32 %v185, %v214
    %v231 = vmul.f32 %v185, %v215
    %v232 = vmul.f32 %v185, %v216
    %v233 = vmul.f32 %v185, %v217
    %v234 = vmul.f32 %v185, %v218
    %v235 = vmul.f32 %v189, %v211
    %v236 = vmul.f32 %v189, %v212
    %v237 = vmul.f32 %v189, %v213
    %v238 = vmul.f32 %v189, %v214
    %v239 = vmul.f32 %v189, %v215
    %v240 = vmul.f32 %v189, %v216
    %v241 = vmul.f32 %v189, %v217
    %v242 = vmul.f32 %v189, %v218
    %v243 = vmul.f32 %v193, %v211
    %v244 = vmul.f32 %v193, %v212
    %v245 = vmul.f32 %v193, %v213
    %v246 = vmul.f32 %v193, %v214
    %v247 = vmul.f32 %v193, %v215
    %v248 = vmul.f32 %v193, %v216
    %v249 = vmul.f32 %v193, %v217
    %v250 = vmul.f32 %v193, %v218
    %v251 = vadd.f32 %v147, %v219
    %v252 = vadd.f32 %v148, %v220
    %v253 = vadd.f32 %v149, %v221
    %v254 = vadd.f32 %v150, %v222
    %v255 = vadd.f32 %v151, %v223
    %v256 = vadd.f32 %v152, %v224
    %v257 = vadd.f32 %v153, %v225
    %v258 = vadd.f32 %v154, %v226
    %v259 = vadd.f32 %v155, %v227
    %v260 = vadd.f32 %v156, %v228
    %v261 = vadd.f32 %v157, %v229
    %v262 = vadd.f32 %v158, %v230
    %v263 = vadd.f32 %v159, %v231
    %v264 = vadd.f32 %v160, %v232
    %v265 = vadd.f32 %v161, %v233
    %v266 = vadd.f32 %v162, %v234
    %v267 = vadd.f32 %v163, %v235
    %v268 = vadd.f32 %v164, %v236
    %v269 = vadd.f32 %v165, %v237
    %v270 = vadd.f32 %v166, %v238
    %v271 = vadd.f32 %v167, %v239
    %v272 = vadd.f32 %v168, %v240
    %v273 = vadd.f32 %v169, %v241
    %v274 = vadd.f32 %v170, %v242
    %v275 = vadd.f32 %v171, %v243
    %v276 = vadd.f32 %v172, %v244
    %v277 = vadd.f32 %v173, %v245
    %v278 = vadd.f32 %v174, %v246
    %v279 = vadd.f32 %v175, %v247
    %v280 = vadd.f32 %v176, %v248
    %v281 = vadd.f32 %v177, %v249
    %v282 = vadd.f32 %v178, %v250
    %283 = vset.pattern.permute.xlu0 2
    %284 = vperm.xlu0 %283, %v39
    %v285 = vpop.permute.xlu0 %284
    %287 = vset.pattern.permute.xlu0 2
    %288 = vperm.xlu0 %287, %v40
    %v289 = vpop.permute.xlu0 %288
    %291 = vset.pattern.permute.xlu0 2
    %292 = vperm.xlu0 %291, %v41
    %v293 = vpop.permute.xlu0 %292
    %295 = vset.pattern.permute.xlu0 2
    %296 = vperm.xlu0 %295, %v42
    %v297 = vpop.permute.xlu0 %296
    %v299 = vperm.slane %v35, 2
    %v300 = vperm.slane %v35, 6
    %v301 = vperm.slane %v36, 2
    %v302 = vperm.slane %v36, 6
    %v303 = vperm.slane %v37, 2
    %v304 = vperm.slane %v37, 6
    %v305 = vperm.slane %v38, 2
    %v306 = vperm.slane %v38, 6
    %v315 = vperm.slane %v299, 2
    %v316 = vperm.slane %v300, 2
    %v317 = vperm.slane %v301, 2
    %v318 = vperm.slane %v302, 2
    %v319 = vperm.slane %v303, 2
    %v320 = vperm.slane %v304, 2
    %v321 = vperm.slane %v305, 2
    %v322 = vperm.slane %v306, 2
    %v323 = vmul.f32 %v285, %v315
    %v324 = vmul.f32 %v285, %v316
    %v325 = vmul.f32 %v285, %v317
    %v326 = vmul.f32 %v285, %v318
    %v327 = vmul.f32 %v285, %v319
    %v328 = vmul.f32 %v285, %v320
    %v329 = vmul.f32 %v285, %v321
    %v330 = vmul.f32 %v285, %v322
    %v331 = vmul.f32 %v289, %v315
    %v332 = vmul.f32 %v289, %v316
    %v333 = vmul.f32 %v289, %v317
    %v334 = vmul.f32 %v289, %v318
    %v335 = vmul.f32 %v289, %v319
    %v336 = vmul.f32 %v289, %v320
    %v337 = vmul.f32 %v289, %v321
    %v338 = vmul.f32 %v289, %v322
    %v339 = vmul.f32 %v293, %v315
    %v340 = vmul.f32 %v293, %v316
    %v341 = vmul.f32 %v293, %v317
    %v342 = vmul.f32 %v293, %v318
    %v343 = vmul.f32 %v293, %v319
    %v344 = vmul.f32 %v293, %v320
    %v345 = vmul.f32 %v293, %v321
    %v346 = vmul.f32 %v293, %v322
    %v347 = vmul.f32 %v297, %v315
    %v348 = vmul.f32 %v297, %v316
    %v349 = vmul.f32 %v297, %v317
    %v350 = vmul.f32 %v297, %v318
    %v351 = vmul.f32 %v297, %v319
    %v352 = vmul.f32 %v297, %v320
    %v353 = vmul.f32 %v297, %v321
    %v354 = vmul.f32 %v297, %v322
    %v355 = vadd.f32 %v251, %v323
    %v356 = vadd.f32 %v252, %v324
    %v357 = vadd.f32 %v253, %v325
    %v358 = vadd.f32 %v254, %v326
    %v359 = vadd.f32 %v255, %v327
    %v360 = vadd.f32 %v256, %v328
    %v361 = vadd.f32 %v257, %v329
    %v362 = vadd.f32 %v258, %v330
    %v363 = vadd.f32 %v259, %v331
    %v364 = vadd.f32 %v260, %v332
    %v365 = vadd.f32 %v261, %v333
    %v366 = vadd.f32 %v262, %v334
    %v367 = vadd.f32 %v263, %v335
    %v368 = vadd.f32 %v264, %v336
    %v369 = vadd.f32 %v265, %v337
    %v370 = vadd.f32 %v266, %v338
    %v371 = vadd.f32 %v267, %v339
    %v372 = vadd.f32 %v268, %v340
    %v373 = vadd.f32 %v269, %v341
    %v374 = vadd.f32 %v270, %v342
    %v375 = vadd.f32 %v271, %v343
    %v376 = vadd.f32 %v272, %v344
    %v377 = vadd.f32 %v273, %v345
    %v378 = vadd.f32 %v274, %v346
    %v379 = vadd.f32 %v275, %v347
    %v380 = vadd.f32 %v276, %v348
    %v381 = vadd.f32 %v277, %v349
    %v382 = vadd.f32 %v278, %v350
    %v383 = vadd.f32 %v279, %v351
    %v384 = vadd.f32 %v280, %v352
    %v385 = vadd.f32 %v281, %v353
    %v386 = vadd.f32 %v282, %v354
    %387 = vset.pattern.permute.xlu0 3
    %388 = vperm.xlu0 %387, %v39
    %v389 = vpop.permute.xlu0 %388
    %391 = vset.pattern.permute.xlu0 3
    %392 = vperm.xlu0 %391, %v40
    %v393 = vpop.permute.xlu0 %392
    %395 = vset.pattern.permute.xlu0 3
    %396 = vperm.xlu0 %395, %v41
    %v397 = vpop.permute.xlu0 %396
    %399 = vset.pattern.permute.xlu0 3
    %400 = vperm.xlu0 %399, %v42
    %v401 = vpop.permute.xlu0 %400
    %v403 = vperm.slane %v35, 3
    %v404 = vperm.slane %v35, 7
    %v405 = vperm.slane %v36, 3
    %v406 = vperm.slane %v36, 7
    %v407 = vperm.slane %v37, 3
    %v408 = vperm.slane %v37, 7
    %v409 = vperm.slane %v38, 3
    %v410 = vperm.slane %v38, 7
    %v419 = vperm.slane %v403, 3
    %v420 = vperm.slane %v404, 3
    %v421 = vperm.slane %v405, 3
    %v422 = vperm.slane %v406, 3
    %v423 = vperm.slane %v407, 3
    %v424 = vperm.slane %v408, 3
    %v425 = vperm.slane %v409, 3
    %v426 = vperm.slane %v410, 3
    %v427 = vmul.f32 %v389, %v419
    %v428 = vmul.f32 %v389, %v420
    %v429 = vmul.f32 %v389, %v421
    %v430 = vmul.f32 %v389, %v422
    %v431 = vmul.f32 %v389, %v423
    %v432 = vmul.f32 %v389, %v424
    %v433 = vmul.f32 %v389, %v425
    %v434 = vmul.f32 %v389, %v426
    %v435 = vmul.f32 %v393, %v419
    %v436 = vmul.f32 %v393, %v420
    %v437 = vmul.f32 %v393, %v421
    %v438 = vmul.f32 %v393, %v422
    %v439 = vmul.f32 %v393, %v423
    %v440 = vmul.f32 %v393, %v424
    %v441 = vmul.f32 %v393, %v425
    %v442 = vmul.f32 %v393, %v426
    %v443 = vmul.f32 %v397, %v419
    %v444 = vmul.f32 %v397, %v420
    %v445 = vmul.f32 %v397, %v421
    %v446 = vmul.f32 %v397, %v422
    %v447 = vmul.f32 %v397, %v423
    %v448 = vmul.f32 %v397, %v424
    %v449 = vmul.f32 %v397, %v425
    %v450 = vmul.f32 %v397, %v426
    %v451 = vmul.f32 %v401, %v419
    %v452 = vmul.f32 %v401, %v420
    %v453 = vmul.f32 %v401, %v421
    %v454 = vmul.f32 %v401, %v422
    %v455 = vmul.f32 %v401, %v423
    %v456 = vmul.f32 %v401, %v424
    %v457 = vmul.f32 %v401, %v425
    %v458 = vmul.f32 %v401, %v426
    %v459 = vadd.f32 %v355, %v427
    %v460 = vadd.f32 %v356, %v428
    %v461 = vadd.f32 %v357, %v429
    %v462 = vadd.f32 %v358, %v430
    %v463 = vadd.f32 %v359, %v431
    %v464 = vadd.f32 %v360, %v432
    %v465 = vadd.f32 %v361, %v433
    %v466 = vadd.f32 %v362, %v434
    %v467 = vadd.f32 %v363, %v435
    %v468 = vadd.f32 %v364, %v436
    %v469 = vadd.f32 %v365, %v437
    %v470 = vadd.f32 %v366, %v438
    %v471 = vadd.f32 %v367, %v439
    %v472 = vadd.f32 %v368, %v440
    %v473 = vadd.f32 %v369, %v441
    %v474 = vadd.f32 %v370, %v442
    %v475 = vadd.f32 %v371, %v443
    %v476 = vadd.f32 %v372, %v444
    %v477 = vadd.f32 %v373, %v445
    %v478 = vadd.f32 %v374, %v446
    %v479 = vadd.f32 %v375, %v447
    %v480 = vadd.f32 %v376, %v448
    %v481 = vadd.f32 %v377, %v449
    %v482 = vadd.f32 %v378, %v450
    %v483 = vadd.f32 %v379, %v451
    %v484 = vadd.f32 %v380, %v452
    %v485 = vadd.f32 %v381, %v453
    %v486 = vadd.f32 %v382, %v454
    %v487 = vadd.f32 %v383, %v455
    %v488 = vadd.f32 %v384, %v456
    %v489 = vadd.f32 %v385, %v457
    %v490 = vadd.f32 %v386, %v458
    %v491 = vmax.f32 %v459, 0.0
    %v492 = vmax.f32 %v460, 0.0
    %v493 = vmax.f32 %v461, 0.0
    %v494 = vmax.f32 %v462, 0.0
    %v495 = vmax.f32 %v463, 0.0
    %v496 = vmax.f32 %v464, 0.0
    %v497 = vmax.f32 %v465, 0.0
    %v498 = vmax.f32 %v466, 0.0
    %v499 = vmax.f32 %v467, 0.0
    %v500 = vmax.f32 %v468, 0.0
    %v501 = vmax.f32 %v469, 0.0
    %v502 = vmax.f32 %v470, 0.0
    %v503 = vmax.f32 %v471, 0.0
    %v504 = vmax.f32 %v472, 0.0
    %v505 = vmax.f32 %v473, 0.0
    %v506 = vmax.f32 %v474, 0.0
    %v507 = vmax.f32 %v475, 0.0
    %v508 = vmax.f32 %v476, 0.0
    %v509 = vmax.f32 %v477, 0.0
    %v510 = vmax.f32 %v478, 0.0
    %v511 = vmax.f32 %v479, 0.0
    %v512 = vmax.f32 %v480, 0.0
    %v513 = vmax.f32 %v481, 0.0
    %v514 = vmax.f32 %v482, 0.0
    %v515 = vmax.f32 %v483, 0.0
    %v516 = vmax.f32 %v484, 0.0
    %v517 = vmax.f32 %v485, 0.0
    %v518 = vmax.f32 %v486, 0.0
    %v519 = vmax.f32 %v487, 0.0
    %v520 = vmax.f32 %v488, 0.0
    %v521 = vmax.f32 %v489, 0.0
    %v522 = vmax.f32 %v490, 0.0
    %v523 = vld [vmem:[%s3] sm:$0xf]
    %v524 = vld [vmem:[%s4] sm:$0xf]
    %526 = vset.pattern.permute.xlu0 0
    %527 = vperm.xlu0 %526, %v524
    %v528 = vpop.permute.xlu0 %527
    %vm530 = vcmask 261120
    %v532 = vsel %vm530, %v523, 0
    %534 = vmatpush.msra.mxu0 0.0
    %535 = vmatpush.msra.mxu0 0.0
    %536 = vmatpush.msra.mxu0 0.0
    %537 = vmatpush.msra.mxu0 0.0
    %538 = vmatpush.msra.mxu0 0.0
    %539 = vmatpush.msra.mxu0 0.0
    %540 = vmatpush.msra.mxu0 0.0
    %541 = vmatpush.msra.mxu0 0.0
    %542 = vmatpush.msra.mxu0 0.0
    %543 = vmatpush.msra.mxu0 0.0
    %544 = vmatpush.msra.mxu0 0.0
    %545 = vmatpush.msra.mxu0 0.0
    %546 = vmatpush.msra.mxu0 %v515
    %547 = vmatpush.msra.mxu0 %v507
    %548 = vmatpush.msra.mxu0 %v499
    %549 = vmatpush.msra.mxu0 %v491
    %550 = vmatmul.f32.gmra.mxu0 %v532
    %v551 = vpop.f32.mrf.mxu0
    %v552 = vadd.f32 %v528, %v551
    %553 = vdwg.mxu0
    %554 = vmatpush.msra.mxu0 0.0
    %555 = vmatpush.msra.mxu0 0.0
    %556 = vmatpush.msra.mxu0 0.0
    %557 = vmatpush.msra.mxu0 0.0
    %558 = vmatpush.msra.mxu0 0.0
    %559 = vmatpush.msra.mxu0 0.0
    %560 = vmatpush.msra.mxu0 0.0
    %561 = vmatpush.msra.mxu0 0.0
    %562 = vmatpush.msra.mxu0 0.0
    %563 = vmatpush.msra.mxu0 0.0
    %564 = vmatpush.msra.mxu0 0.0
    %565 = vmatpush.msra.mxu0 0.0
    %566 = vmatpush.msra.mxu0 %v516
    %567 = vmatpush.msra.mxu0 %v508
    %568 = vmatpush.msra.mxu0 %v500
    %569 = vmatpush.msra.mxu0 %v492
    %570 = vmatmul.f32.gmra.mxu0 %v532
    %v571 = vpop.f32.mrf.mxu0
    %v572 = vadd.f32 %v528, %v571
    %573 = vdwg.mxu0
    %574 = vmatpush.msra.mxu0 0.0
    %575 = vmatpush.msra.mxu0 0.0
    %576 = vmatpush.msra.mxu0 0.0
    %577 = vmatpush.msra.mxu0 0.0
    %578 = vmatpush.msra.mxu0 0.0
    %579 = vmatpush.msra.mxu0 0.0
    %580 = vmatpush.msra.mxu0 0.0
    %581 = vmatpush.msra.mxu0 0.0
    %582 = vmatpush.msra.mxu0 0.0
    %583 = vmatpush.msra.mxu0 0.0
    %584 = vmatpush.msra.mxu0 0.0
    %585 = vmatpush.msra.mxu0 0.0
    %586 = vmatpush.msra.mxu0 %v517
    %587 = vmatpush.msra.mxu0 %v509
    %588 = vmatpush.msra.mxu0 %v501
    %589 = vmatpush.msra.mxu0 %v493
    %590 = vmatmul.f32.gmra.mxu0 %v532
    %v591 = vpop.f32.mrf.mxu0
    %v592 = vadd.f32 %v528, %v591
    %593 = vdwg.mxu0
    %594 = vmatpush.msra.mxu0 0.0
    %595 = vmatpush.msra.mxu0 0.0
    %596 = vmatpush.msra.mxu0 0.0
    %597 = vmatpush.msra.mxu0 0.0
    %598 = vmatpush.msra.mxu0 0.0
    %599 = vmatpush.msra.mxu0 0.0
    %600 = vmatpush.msra.mxu0 0.0
    %601 = vmatpush.msra.mxu0 0.0
    %602 = vmatpush.msra.mxu0 0.0
    %603 = vmatpush.msra.mxu0 0.0
    %604 = vmatpush.msra.mxu0 0.0
    %605 = vmatpush.msra.mxu0 0.0
    %606 = vmatpush.msra.mxu0 %v518
    %607 = vmatpush.msra.mxu0 %v510
    %608 = vmatpush.msra.mxu0 %v502
    %609 = vmatpush.msra.mxu0 %v494
    %610 = vmatmul.f32.gmra.mxu0 %v532
    %v611 = vpop.f32.mrf.mxu0
    %v612 = vadd.f32 %v528, %v611
    %613 = vdwg.mxu0
    %614 = vmatpush.msra.mxu0 0.0
    %615 = vmatpush.msra.mxu0 0.0
    %616 = vmatpush.msra.mxu0 0.0
    %617 = vmatpush.msra.mxu0 0.0
    %618 = vmatpush.msra.mxu0 0.0
    %619 = vmatpush.msra.mxu0 0.0
    %620 = vmatpush.msra.mxu0 0.0
    %621 = vmatpush.msra.mxu0 0.0
    %622 = vmatpush.msra.mxu0 0.0
    %623 = vmatpush.msra.mxu0 0.0
    %624 = vmatpush.msra.mxu0 0.0
    %625 = vmatpush.msra.mxu0 0.0
    %626 = vmatpush.msra.mxu0 %v519
    %627 = vmatpush.msra.mxu0 %v511
    %628 = vmatpush.msra.mxu0 %v503
    %629 = vmatpush.msra.mxu0 %v495
    %630 = vmatmul.f32.gmra.mxu0 %v532
    %v631 = vpop.f32.mrf.mxu0
    %v632 = vadd.f32 %v528, %v631
    %633 = vdwg.mxu0
    %634 = vmatpush.msra.mxu0 0.0
    %635 = vmatpush.msra.mxu0 0.0
    %636 = vmatpush.msra.mxu0 0.0
    %637 = vmatpush.msra.mxu0 0.0
    %638 = vmatpush.msra.mxu0 0.0
    %639 = vmatpush.msra.mxu0 0.0
    %640 = vmatpush.msra.mxu0 0.0
    %641 = vmatpush.msra.mxu0 0.0
    %642 = vmatpush.msra.mxu0 0.0
    %643 = vmatpush.msra.mxu0 0.0
    %644 = vmatpush.msra.mxu0 0.0
    %645 = vmatpush.msra.mxu0 0.0
    %646 = vmatpush.msra.mxu0 %v520
    %647 = vmatpush.msra.mxu0 %v512
    %648 = vmatpush.msra.mxu0 %v504
    %649 = vmatpush.msra.mxu0 %v496
    %650 = vmatmul.f32.gmra.mxu0 %v532
    %v651 = vpop.f32.mrf.mxu0
    %v652 = vadd.f32 %v528, %v651
    %653 = vdwg.mxu0
    %654 = vmatpush.msra.mxu0 0.0
    %655 = vmatpush.msra.mxu0 0.0
    %656 = vmatpush.msra.mxu0 0.0
    %657 = vmatpush.msra.mxu0 0.0
    %658 = vmatpush.msra.mxu0 0.0
    %659 = vmatpush.msra.mxu0 0.0
    %660 = vmatpush.msra.mxu0 0.0
    %661 = vmatpush.msra.mxu0 0.0
    %662 = vmatpush.msra.mxu0 0.0
    %663 = vmatpush.msra.mxu0 0.0
    %664 = vmatpush.msra.mxu0 0.0
    %665 = vmatpush.msra.mxu0 0.0
    %666 = vmatpush.msra.mxu0 %v521
    %667 = vmatpush.msra.mxu0 %v513
    %668 = vmatpush.msra.mxu0 %v505
    %669 = vmatpush.msra.mxu0 %v497
    %670 = vmatmul.f32.gmra.mxu0 %v532
    %v671 = vpop.f32.mrf.mxu0
    %v672 = vadd.f32 %v528, %v671
    %673 = vdwg.mxu0
    %674 = vmatpush.msra.mxu0 0.0
    %675 = vmatpush.msra.mxu0 0.0
    %676 = vmatpush.msra.mxu0 0.0
    %677 = vmatpush.msra.mxu0 0.0
    %678 = vmatpush.msra.mxu0 0.0
    %679 = vmatpush.msra.mxu0 0.0
    %680 = vmatpush.msra.mxu0 0.0
    %681 = vmatpush.msra.mxu0 0.0
    %682 = vmatpush.msra.mxu0 0.0
    %683 = vmatpush.msra.mxu0 0.0
    %684 = vmatpush.msra.mxu0 0.0
    %685 = vmatpush.msra.mxu0 0.0
    %686 = vmatpush.msra.mxu0 %v522
    %687 = vmatpush.msra.mxu0 %v514
    %688 = vmatpush.msra.mxu0 %v506
    %689 = vmatpush.msra.mxu0 %v498
    %690 = vmatmul.f32.gmra.mxu0 %v532
    %v691 = vpop.f32.mrf.mxu0
    %v692 = vadd.f32 %v528, %v691
    %693 = vdwg.mxu0
    %v694 = vmul.f32 %v552, 0.5
    %v695 = vmul.f32 %v572, 0.5
    %v696 = vmul.f32 %v592, 0.5
    %v697 = vmul.f32 %v612, 0.5
    %v698 = vmul.f32 %v632, 0.5
    %v699 = vmul.f32 %v652, 0.5
    %v700 = vmul.f32 %v672, 0.5
    %v701 = vmul.f32 %v692, 0.5
    %v702 = vtanh.pop %v694
    %v703 = vtanh.pop %v695
    %v704 = vtanh.pop %v696
    %v705 = vtanh.pop %v697
    %v706 = vtanh.pop %v698
    %v707 = vtanh.pop %v699
    %v708 = vtanh.pop %v700
    %v709 = vtanh.pop %v701
    %v710 = vmul.f32 %v702, 0.5
    %v711 = vmul.f32 %v703, 0.5
    %v712 = vmul.f32 %v704, 0.5
    %v713 = vmul.f32 %v705, 0.5
    %v714 = vmul.f32 %v706, 0.5
    %v715 = vmul.f32 %v707, 0.5
    %v716 = vmul.f32 %v708, 0.5
    %v717 = vmul.f32 %v709, 0.5
    %v718 = vadd.f32 %v710, 0.5
    %v719 = vadd.f32 %v711, 0.5
    %v720 = vadd.f32 %v712, 0.5
    %v721 = vadd.f32 %v713, 0.5
    %v722 = vadd.f32 %v714, 0.5
    %v723 = vadd.f32 %v715, 0.5
    %v724 = vadd.f32 %v716, 0.5
    %v725 = vadd.f32 %v717, 0.5
    %v734 = vrot.slane %v719, 4
    %v735 = vrot.slane %v721, 4
    %v736 = vrot.slane %v723, 4
    %v737 = vrot.slane %v725, 4
    %vm738 = vcmask 1043456
    %v739 = vsel %vm738, %v718, %v734
    %v740 = vsel %vm738, %v720, %v735
    %v741 = vsel %vm738, %v722, %v736
    %v742 = vsel %vm738, %v724, %v737
    %747 = vst [vmem:[#allocation2] sm:$0xff] %v739
    %748 = vst [vmem:[#allocation2 + $0x8] sm:$0xff] %v740
    %749 = vst [vmem:[#allocation2 + $0x10] sm:$0xff] %v741
    %750 = vst [vmem:[#allocation2 + $0x18] sm:$0xff] %v742
    %v751 = vsel %vm738, %v718, 0.0
    %v752 = vsel %vm738, %v719, 0.0
    %v753 = vadd.f32 %v751, %v752
    %v754 = vsel %vm738, %v720, 0.0
    %v755 = vadd.f32 %v753, %v754
    %v756 = vsel %vm738, %v721, 0.0
    %v757 = vadd.f32 %v755, %v756
    %v758 = vsel %vm738, %v722, 0.0
    %v759 = vadd.f32 %v757, %v758
    %v760 = vsel %vm738, %v723, 0.0
    %v761 = vadd.f32 %v759, %v760
    %v762 = vsel %vm738, %v724, 0.0
    %v763 = vadd.f32 %v761, %v762
    %v764 = vsel %vm738, %v725, 0.0
    %v765 = vadd.f32 %v763, %v764
    %766 = vadd.xlane.f32.xlu0 %v765
    %v767 = vpop.xlane.xlu0 %766
    %v768 = vrcp.pop 1024.0
    %v769 = vmul.f32 1024.0, %v768
    %v770 = vsub.f32 1.0, %v769
    %v771 = vmul.f32 %v768, %v770
    %v772 = vadd.f32 %v768, %v771
    %vm773 = vweird.f32 %v768
    %v774 = vsel %vm773, %v768, %v772
    %v775 = vmul.f32 %v767, %v774
    %vm776 = vcmask 3072
    %777 = vst.msk [vmem:[%s9] sm:$0xf] %vm776, %v775
    %vm778 = vcmp.ge.f32.partialorder %v718, 0.8
    %vm779 = vcmp.ge.f32.partialorder %v719, 0.8
    %vm780 = vcmp.ge.f32.partialorder %v720, 0.8
    %vm781 = vcmp.ge.f32.partialorder %v721, 0.8
    %vm782 = vcmp.ge.f32.partialorder %v722, 0.8
    %vm783 = vcmp.ge.f32.partialorder %v723, 0.8
    %vm784 = vcmp.ge.f32.partialorder %v724, 0.8
    %vm785 = vcmp.ge.f32.partialorder %v725, 0.8
    %v786 = vsel %vm778, 1.0, 0.0
    %v787 = vsel %vm779, 1.0, 0.0
    %v788 = vsel %vm780, 1.0, 0.0
    %v789 = vsel %vm781, 1.0, 0.0
    %v790 = vsel %vm782, 1.0, 0.0
    %v791 = vsel %vm783, 1.0, 0.0
    %v792 = vsel %vm784, 1.0, 0.0
    %v793 = vsel %vm785, 1.0, 0.0
    %vm794 = vcmp.ge.f32.partialorder %v718, 0.5
    %vm795 = vcmp.ge.f32.partialorder %v719, 0.5
    %vm796 = vcmp.ge.f32.partialorder %v720, 0.5
    %vm797 = vcmp.ge.f32.partialorder %v721, 0.5
    %vm798 = vcmp.ge.f32.partialorder %v722, 0.5
    %vm799 = vcmp.ge.f32.partialorder %v723, 0.5
    %vm800 = vcmp.ge.f32.partialorder %v724, 0.5
    %vm801 = vcmp.ge.f32.partialorder %v725, 0.5
    %v802 = vsel %vm794, 1.0, 0.0
    %v803 = vsel %vm795, 1.0, 0.0
    %v804 = vsel %vm796, 1.0, 0.0
    %v805 = vsel %vm797, 1.0, 0.0
    %v806 = vsel %vm798, 1.0, 0.0
    %v807 = vsel %vm799, 1.0, 0.0
    %v808 = vsel %vm800, 1.0, 0.0
    %v809 = vsel %vm801, 1.0, 0.0
    %v818 = vrot.slane %v802, 4
    %v819 = vrot.slane %v803, 4
    %v820 = vrot.slane %v804, 4
    %v821 = vrot.slane %v805, 4
    %v822 = vrot.slane %v806, 4
    %v823 = vrot.slane %v807, 4
    %v824 = vrot.slane %v808, 4
    %v825 = vrot.slane %v809, 4
    %v834 = vsel %vm738, %v786, %v818
    %v835 = vsel %vm738, %v787, %v819
    %v836 = vsel %vm738, %v788, %v820
    %v837 = vsel %vm738, %v789, %v821
    %v838 = vsel %vm738, %v790, %v822
    %v839 = vsel %vm738, %v791, %v823
    %v840 = vsel %vm738, %v792, %v824
    %v841 = vsel %vm738, %v793, %v825
    %v842 = vadd.f32 %v834, %v835
    %v843 = vadd.f32 %v842, %v836
    %v844 = vadd.f32 %v843, %v837
    %v845 = vadd.f32 %v844, %v838
    %v846 = vadd.f32 %v845, %v839
    %v847 = vadd.f32 %v846, %v840
    %v848 = vadd.f32 %v847, %v841
    %849 = vadd.xlane.f32.xlu0 %v848
    %v850 = vpop.xlane.xlu0 %849
    %v851 = vpack.c.bf16 %v834, %v834
    %v852 = vpack.c.bf16 %v835, %v835
    %v853 = vpack.c.bf16 %v836, %v836
    %v854 = vpack.c.bf16 %v837, %v837
    %v855 = vpack.c.bf16 %v838, %v838
    %v856 = vpack.c.bf16 %v839, %v839
    %v857 = vpack.c.bf16 %v840, %v840
    %v858 = vpack.c.bf16 %v841, %v841
    %v859 = vpack.c.bf16 %v499, %v491
    %v860 = vpack.c.bf16 %v500, %v492
    %v861 = vpack.c.bf16 %v501, %v493
    %v862 = vpack.c.bf16 %v502, %v494
    %v863 = vpack.c.bf16 %v503, %v495
    %v864 = vpack.c.bf16 %v504, %v496
    %v865 = vpack.c.bf16 %v505, %v497
    %v866 = vpack.c.bf16 %v506, %v498
    %v867 = vpack.c.bf16 %v515, %v507
    %v868 = vpack.c.bf16 %v516, %v508
    %v869 = vpack.c.bf16 %v517, %v509
    %v870 = vpack.c.bf16 %v518, %v510
    %v871 = vpack.c.bf16 %v519, %v511
    %v872 = vpack.c.bf16 %v520, %v512
    %v873 = vpack.c.bf16 %v521, %v513
    %v874 = vpack.c.bf16 %v522, %v514
    %875 = vmatpush.bf16.xpose.msra.mxu0 0
    %876 = vmatpush.bf16.xpose.msra.mxu0 0
    %877 = vmatpush.bf16.xpose.msra.mxu0 0
    %878 = vmatpush.bf16.xpose.msra.mxu0 0
    %879 = vmatpush.bf16.xpose.msra.mxu0 0
    %880 = vmatpush.bf16.xpose.msra.mxu0 0
    %881 = vmatpush.bf16.xpose.msra.mxu0 %v867
    %882 = vmatpush.bf16.xpose.msra.mxu0 %v859
    %883 = vmatmul.bf16.gmra.mxu0 %v851
    %v884 = vpop.f32.mrf.mxu0
    %v885 = vadd.f32 0.0, %v884
    %v886 = vpop.f32.mrf.mxu0
    %887 = vdwg.mxu0
    %888 = vmatpush.bf16.xpose.msra.mxu0 0
    %889 = vmatpush.bf16.xpose.msra.mxu0 0
    %890 = vmatpush.bf16.xpose.msra.mxu0 0
    %891 = vmatpush.bf16.xpose.msra.mxu0 0
    %892 = vmatpush.bf16.xpose.msra.mxu0 0
    %893 = vmatpush.bf16.xpose.msra.mxu0 0
    %894 = vmatpush.bf16.xpose.msra.mxu0 %v868
    %895 = vmatpush.bf16.xpose.msra.mxu0 %v860
    %896 = vmatmul.bf16.gmra.mxu0 %v852
    %v897 = vpop.f32.mrf.mxu0
    %v898 = vadd.f32 %v885, %v897
    %v899 = vpop.f32.mrf.mxu0
    %900 = vdwg.mxu0
    %901 = vmatpush.bf16.xpose.msra.mxu0 0
    %902 = vmatpush.bf16.xpose.msra.mxu0 0
    %903 = vmatpush.bf16.xpose.msra.mxu0 0
    %904 = vmatpush.bf16.xpose.msra.mxu0 0
    %905 = vmatpush.bf16.xpose.msra.mxu0 0
    %906 = vmatpush.bf16.xpose.msra.mxu0 0
    %907 = vmatpush.bf16.xpose.msra.mxu0 %v869
    %908 = vmatpush.bf16.xpose.msra.mxu0 %v861
    %909 = vmatmul.bf16.gmra.mxu0 %v853
    %v910 = vpop.f32.mrf.mxu0
    %v911 = vadd.f32 %v898, %v910
    %v912 = vpop.f32.mrf.mxu0
    %913 = vdwg.mxu0
    %914 = vmatpush.bf16.xpose.msra.mxu0 0
    %915 = vmatpush.bf16.xpose.msra.mxu0 0
    %916 = vmatpush.bf16.xpose.msra.mxu0 0
    %917 = vmatpush.bf16.xpose.msra.mxu0 0
    %918 = vmatpush.bf16.xpose.msra.mxu0 0
    %919 = vmatpush.bf16.xpose.msra.mxu0 0
    %920 = vmatpush.bf16.xpose.msra.mxu0 %v870
    %921 = vmatpush.bf16.xpose.msra.mxu0 %v862
    %922 = vmatmul.bf16.gmra.mxu0 %v854
    %v923 = vpop.f32.mrf.mxu0
    %v924 = vadd.f32 %v911, %v923
    %v925 = vpop.f32.mrf.mxu0
    %926 = vdwg.mxu0
    %927 = vmatpush.bf16.xpose.msra.mxu0 0
    %928 = vmatpush.bf16.xpose.msra.mxu0 0
    %929 = vmatpush.bf16.xpose.msra.mxu0 0
    %930 = vmatpush.bf16.xpose.msra.mxu0 0
    %931 = vmatpush.bf16.xpose.msra.mxu0 0
    %932 = vmatpush.bf16.xpose.msra.mxu0 0
    %933 = vmatpush.bf16.xpose.msra.mxu0 %v871
    %934 = vmatpush.bf16.xpose.msra.mxu0 %v863
    %935 = vmatmul.bf16.gmra.mxu0 %v855
    %v936 = vpop.f32.mrf.mxu0
    %v937 = vadd.f32 %v924, %v936
    %v938 = vpop.f32.mrf.mxu0
    %939 = vdwg.mxu0
    %940 = vmatpush.bf16.xpose.msra.mxu0 0
    %941 = vmatpush.bf16.xpose.msra.mxu0 0
    %942 = vmatpush.bf16.xpose.msra.mxu0 0
    %943 = vmatpush.bf16.xpose.msra.mxu0 0
    %944 = vmatpush.bf16.xpose.msra.mxu0 0
    %945 = vmatpush.bf16.xpose.msra.mxu0 0
    %946 = vmatpush.bf16.xpose.msra.mxu0 %v872
    %947 = vmatpush.bf16.xpose.msra.mxu0 %v864
    %948 = vmatmul.bf16.gmra.mxu0 %v856
    %v949 = vpop.f32.mrf.mxu0
    %v950 = vadd.f32 %v937, %v949
    %v951 = vpop.f32.mrf.mxu0
    %952 = vdwg.mxu0
    %953 = vmatpush.bf16.xpose.msra.mxu0 0
    %954 = vmatpush.bf16.xpose.msra.mxu0 0
    %955 = vmatpush.bf16.xpose.msra.mxu0 0
    %956 = vmatpush.bf16.xpose.msra.mxu0 0
    %957 = vmatpush.bf16.xpose.msra.mxu0 0
    %958 = vmatpush.bf16.xpose.msra.mxu0 0
    %959 = vmatpush.bf16.xpose.msra.mxu0 %v873
    %960 = vmatpush.bf16.xpose.msra.mxu0 %v865
    %961 = vmatmul.bf16.gmra.mxu0 %v857
    %v962 = vpop.f32.mrf.mxu0
    %v963 = vadd.f32 %v950, %v962
    %v964 = vpop.f32.mrf.mxu0
    %965 = vdwg.mxu0
    %966 = vmatpush.bf16.xpose.msra.mxu0 0
    %967 = vmatpush.bf16.xpose.msra.mxu0 0
    %968 = vmatpush.bf16.xpose.msra.mxu0 0
    %969 = vmatpush.bf16.xpose.msra.mxu0 0
    %970 = vmatpush.bf16.xpose.msra.mxu0 0
    %971 = vmatpush.bf16.xpose.msra.mxu0 0
    %972 = vmatpush.bf16.xpose.msra.mxu0 %v874
    %973 = vmatpush.bf16.xpose.msra.mxu0 %v866
    %974 = vmatmul.bf16.gmra.mxu0 %v858
    %v975 = vpop.f32.mrf.mxu0
    %v976 = vadd.f32 %v963, %v975
    %v977 = vpop.f32.mrf.mxu0
    %978 = vdwg.mxu0
    %v979 = vadd.f32 %v850, 1e-06
    %v980 = vrcp.pop %v979
    %v981 = vmul.f32 %v976, %v980
    %v982 = vpack.c.bf16 %v981, %v981
    %v983 = vld [vmem:[%s5] sm:$0xf]
    %v984 = vld [vmem:[%s5 + $0x4] sm:$0xf]
    %v985 = vld [vmem:[%s5 + $0x8] sm:$0xf]
    %v986 = vld [vmem:[%s5 + $0xc] sm:$0xf]
    %v991 = vunpack.c.l.b16 %v983
    %v992 = vunpack.c.l.b16 %v984
    %v993 = vunpack.c.l.b16 %v985
    %v994 = vunpack.c.l.b16 %v986
    %v995 = vpack.c.b16 %v992, %v991
    %v996 = vpack.c.b16 %v994, %v993
    %v1000 = vsel %vm530, %v982, 0
    %1002 = vmatpush.bf16.msra.mxu0 0
    %1003 = vmatpush.bf16.msra.mxu0 0
    %1004 = vmatpush.bf16.msra.mxu0 0
    %1005 = vmatpush.bf16.msra.mxu0 0
    %1006 = vmatpush.bf16.msra.mxu0 0
    %1007 = vmatpush.bf16.msra.mxu0 0
    %1008 = vmatpush.bf16.msra.mxu0 %v996
    %1009 = vmatpush.bf16.msra.mxu0 %v995
    %1010 = vmatmul.bf16.gmra.mxu0 %v1000
    %v1011 = vpop.f32.mrf.mxu0
    %v1012 = vadd.f32 0.0, %v1011
    %v1013 = vpop.f32.mrf.mxu0
    %1014 = vdwg.mxu0
    %v1015 = vld [vmem:[%s6] sm:$0xf]
    %v1016 = vld [vmem:[%s6 + $0x4] sm:$0xf]
    %v1017 = vld [vmem:[%s6 + $0x8] sm:$0xf]
    %v1018 = vld [vmem:[%s6 + $0xc] sm:$0xf]
    %v1020 = vrot.slane %v982, 2
    %v1025 = vunpack.c.l.b16 %v1015
    %v1026 = vunpack.c.l.b16 %v1016
    %v1027 = vunpack.c.l.b16 %v1017
    %v1028 = vunpack.c.l.b16 %v1018
    %v1029 = vpack.c.b16 %v1026, %v1025
    %v1030 = vpack.c.b16 %v1028, %v1027
    %v1034 = vsel %vm530, %v1020, 0
    %1036 = vmatpush.bf16.msra.mxu0 0
    %1037 = vmatpush.bf16.msra.mxu0 0
    %1038 = vmatpush.bf16.msra.mxu0 0
    %1039 = vmatpush.bf16.msra.mxu0 0
    %1040 = vmatpush.bf16.msra.mxu0 0
    %1041 = vmatpush.bf16.msra.mxu0 0
    %1042 = vmatpush.bf16.msra.mxu0 %v1030
    %1043 = vmatpush.bf16.msra.mxu0 %v1029
    %1044 = vmatmul.bf16.gmra.mxu0 %v1034
    %v1045 = vpop.f32.mrf.mxu0
    %v1046 = vadd.f32 0.0, %v1045
    %v1047 = vpop.f32.mrf.mxu0
    %1048 = vdwg.mxu0
    %v1050 = vrot.slane %v1046, 2
    %v1052 = vadd.f32 %v1012, %v1050
    %v1053 = vrot.slane %v1046, 3
    %v1055 = vadd.f32 %v1012, %v1053
    %v1056 = vrot.slane %v1046, 1
    %v1058 = vadd.f32 %v1012, %v1056
    %v1060 = vrot.slane %v1055, 7
    %v1063 = vrot.slane %v1058, 7
    %v1066 = vrot.slane %v1052, 6
    %vm1068 = vcmask 1040384
    %v1069 = vsel %vm1068, %v1052, %v1060
    %vm1070 = vcmask 1041408
    %v1071 = vsel %vm1070, %v1069, %v1063
    %vm1072 = vcmask 1042432
    %v1073 = vsel %vm1072, %v1071, %v1066
    %v1074 = vsel %vm738, %v1073, 0.0
    %vm1075 = vcmask 1044480
    %v1076 = vsel %vm1075, %v1074, 0.0
    %vm1077 = vcmask 1045504
    %v1078 = vsel %vm1077, %v1076, 0.0
    %vm1079 = vcmask 1046528
    %v1080 = vsel %vm1079, %v1078, 0.0
    %v1081 = vld [vmem:[%s7] sm:$0x1]
    %v1083 = vperm.slane %v1081, 0
    %v1085 = vadd.f32 %v1080, %v1083
    %vm1086 = vcmask 130048
    %1087 = vst.msk [vmem:[#allocation4] sm:$0xff] %vm1086, %v1085
    // Predicated region
    $region34: #{_device_forward.1} parent=1 // pred_check
      _
    $region35: #{_device_forward.1} parent=1 // pred_check_branch
      %1089 = sbr.rel (0) target = $region37
    $region36: #{_device_forward.1} parent=1 // pred_region
      %1091 = vsyncadd [#allocation3], 0
      %s1093 = sshll.u32 [#allocation2], 4
      %s1094 = int_to_ptr.vmem [resolvable:$true] %s1093
      %s1095 = sshll.u32 %s8, 4
      %s1096 = int_to_ptr.hbm [resolvable:$true] %s1095
      %1098 = dma.vmem_to_hbm [thread:$0]  %s1094, 512, %s1096, [#allocation3]
    $region37: #{_device_forward.1} parent=1 // pred_fallthru
      _
    // Predicated region
    $region38: #{_device_forward.1} parent=1 // pred_check
      _
    $region39: #{_device_forward.1} parent=1 // pred_check_branch
      %1100 = sbr.rel (0) target = $region41
    $region40: #{_device_forward.1} parent=1 // pred_region
      _
    $region41: #{_device_forward.1} parent=1 // pred_fallthru
      _
    // Predicated region
    $region42: #{_device_forward.1} parent=1 // pred_check
      _
    $region43: #{_device_forward.1} parent=1 // pred_check_branch
      %1102 = sbr.rel (0) target = $region45
    $region44: #{_device_forward.1} parent=1 // pred_region
      %1104 = vsyncadd [#allocation5], 0
      %s1106 = sshll.u32 [#allocation4], 4
      %s1107 = int_to_ptr.vmem [resolvable:$true] %s1106
      %s1108 = sshll.u32 %s10, 4
      %s1109 = int_to_ptr.hbm [resolvable:$true] %s1108
      %1111 = dma.vmem_to_hbm [thread:$0]  %s1107, 128, %s1109, [#allocation5]
    $region45: #{_device_forward.1} parent=1 // pred_fallthru
      _
    // Predicated region
    $region46: #{_device_forward.1} parent=1 // pred_check
      _
    $region47: #{_device_forward.1} parent=1 // pred_check_branch
      %1113 = sbr.rel (0) target = $region49
    $region48: #{_device_forward.1} parent=1 // pred_region
      %1115 = dma.done [#allocation3], 512
    $region49: #{_device_forward.1} parent=1 // pred_fallthru
      _
    // Predicated region
    $region50: #{_device_forward.1} parent=1 // pred_check
      _
    $region51: #{_device_forward.1} parent=1 // pred_check_branch
      %1117 = sbr.rel (0) target = $region53
    $region52: #{_device_forward.1} parent=1 // pred_region
      _
    $region53: #{_device_forward.1} parent=1 // pred_fallthru
      _
    // Predicated region
    $region54: #{_device_forward.1} parent=1 // pred_check
      _
    $region55: #{_device_forward.1} parent=1 // pred_check_branch
      %1119 = sbr.rel (0) target = $region57
    $region56: #{_device_forward.1} parent=1 // pred_region
      %1121 = dma.done [#allocation5], 128
    $region57: #{_device_forward.1} parent=1 // pred_fallthru
      _
    %1122 = vsyncpa [#allocation3], 1
    %1123 = vsyncpa [#allocation5], 1

</llo_original>
